<compile_context>
chip_gen: v7x
topology: tpu7x:2x2x1
jax: 0.10.0
libtpu: 0.0.40
codegen_flags: <defaults>
</compile_context>

<pallas_src>
import functools

import numpy as np
import jax
import jax.numpy as jnp
from jax import lax
from jax.experimental import pallas as pl
from jax.experimental.pallas import tpu as pltpu

DAYS_TRAIN = 5


# ----------------------------------------------------------------------------
# Fused kernel: 2-layer LSTM recurrence + composed (ln2 ∘ ln1) head.
# Gate order matches PyTorch ([i, f, g, o]); layer-0 input size == 1.
# State layouts (lane blocks of width H):
#   hcat   (B, 2H) = [h0 | h1]        c_comb (B, 2H) = [c0 | c1]
#   gates  (B, 8H) = [i0 i1 f0 f1 g0 g1 o0 o1]   ("0" = layer-0 @ t+1,
#                                                 "1" = layer-1 @ t)
# ----------------------------------------------------------------------------
def _net_kernel(x_ref, wbig_ref, wih0w_ref, bw_ref, wc_ref, bhead_ref,
                out_ref, *, H, T, B, NPAD):
    H2, H4, H6, H8 = 2 * H, 4 * H, 6 * H, 8 * H

    # ---- hoisted constants ----
    lane8 = lax.broadcasted_iota(jnp.int32, (B, H8), 1)
    tanh_sel = (lane8 >= H4) & (lane8 < H6)        # "g" gate lanes (both layers)
    lane2 = lax.broadcasted_iota(jnp.int32, (B, H2), 1)
    l0_half = lane2 < H                            # layer-0 half of the 2H state
    out_lane = lax.broadcasted_iota(jnp.int32, (1, NPAD), 1)

    wbig = wbig_ref[...]       # (2H, 8H) fused recurrent + layer-1 weights
    wih0w = wih0w_ref[...]     # (1, 8H)  layer-0 input weight (layer-1 lanes 0)
    bw = bw_ref[...]           # (1, 8H)  [b0 | b1] interleaved per gate block
    wc = wc_ref[...]           # (B, H)   composed head weight (ln2 @ ln1)
    bhead = bhead_ref[...]     # (1, 1)   composed head bias

    def activate(g):
        # One EUP tanh for the whole (B, 8H) gate vector:
        #   sigmoid(x) == 0.5 * (1 + tanh(0.5 * x)) on the i/f/o lanes.
        th = jnp.tanh(jnp.where(tanh_sel, g, 0.5 * g))
        return jnp.where(tanh_sel, th, 0.5 * th + 0.5)

    def cell(acts, c_prev):
        # Combined 2-layer cell update on (B, 2H) state [layer-0 | layer-1].
        i_c = acts[:, 0:H2]
        f_c = acts[:, H2:H4]
        g_c = acts[:, H4:H6]
        o_c = acts[:, H6:H8]
        c_new = f_c * c_prev + i_c * g_c
        h_new = o_c * jnp.tanh(c_new)
        return h_new, c_new

    # ---- peel: layer-0 at t = 0 (h_{-1} = c_{-1} = 0 -> no matmul needed) ----
    g = x_ref[:, 0:1] * wih0w + bw                 # (B,1)*(1,8H) broadcast
    h_new, c_new = cell(activate(g), jnp.zeros((B, H2), jnp.float32))
    c_comb = jnp.where(l0_half, c_new, 0.0)        # [c0_0 | 0]
    hcat = jnp.where(l0_half, h_new, 0.0)          # [h0_0 | 0]

    out_acc = jnp.zeros((1, NPAD), jnp.float32)

    # ---- recurrence, fully unrolled (T is a small static constant).
    # Per step: one MXU push, one full-width gate activation, one tanh(c);
    # the cell output IS the next step's matmul input (no lane movement).
    for t in range(T):
        big = jnp.dot(hcat, wbig, preferred_element_type=jnp.float32)  # (B, 8H)
        g = big + x_ref[:, t + 1:t + 2] * wih0w + bw
        hcat, c_comb = cell(activate(g), c_comb)   # hcat = [h0_{t+1} | h1_t]

        # Composed head (ln2∘ln1 is a single linear map) — off the critical
        # path:  out[t] = sum_{b,h} h1_t[b,h] * Wc[b,h] + b_head
        h1_t = hcat[:, H:H2]
        v = jnp.sum(h1_t * wc, axis=1, keepdims=True)    # (B, 1) lane reduce
        v = jnp.sum(v, axis=0, keepdims=True) + bhead    # (1, 1) sublane reduce
        out_acc = jnp.where(out_lane == t, v, out_acc)   # lane-dense accumulate

    out_ref[...] = out_acc                         # one dense (1, NPAD) store


# ----------------------------------------------------------------------------
# Parameters in the original PyTorch layout (deterministic uniform init).
# ----------------------------------------------------------------------------
def init_params(key, H, input_size=1, output_size=1):
    keys = jax.random.split(key, 12)
    u = lambda k, shape, s: jax.random.uniform(k, shape, jnp.float32, -s, s)
    k_lstm = 1.0 / np.sqrt(H)
    p = dict(
        wih0=u(keys[0], (4 * H, input_size), k_lstm),
        whh0=u(keys[1], (4 * H, H), k_lstm),
        bih0=u(keys[2], (4 * H,), k_lstm),
        bhh0=u(keys[3], (4 * H,), k_lstm),
        wih1=u(keys[4], (4 * H, H), k_lstm),
        whh1=u(keys[5], (4 * H, H), k_lstm),
        bih1=u(keys[6], (4 * H,), k_lstm),
        bhh1=u(keys[7], (4 * H,), k_lstm),
    )
    k1 = 1.0 / np.sqrt(H * DAYS_TRAIN)
    p["w_ln1"] = u(keys[8], (H, H * DAYS_TRAIN), k1)
    p["b_ln1"] = u(keys[9], (H,), k1)
    k2 = 1.0 / np.sqrt(H)
    p["w_ln2"] = u(keys[10], (output_size, H), k2)
    p["b_ln2"] = u(keys[11], (output_size,), k2)
    return p


# ----------------------------------------------------------------------------
# Pack the PyTorch-layout params into the fused kernel layout (plain JAX).
# ----------------------------------------------------------------------------
def pack_params(p):
    H = p["whh0"].shape[1]
    B = DAYS_TRAIN
    assert p["wih0"].shape[1] == 1, "kernel specialises layer-0 input to I == 1"
    assert p["w_ln2"].shape[0] == 1, "kernel specialises the head to output_size == 1"

    whh0_t = p["whh0"].T                       # (H, 4H), gate order [i, f, g, o]
    wih1_t = p["wih1"].T                       # (H, 4H)
    whh1_t = p["whh1"].T                       # (H, 4H)
    wih0_t = p["wih0"].T                       # (1, 4H)
    b0 = (p["bih0"] + p["bhh0"]).reshape(1, 4 * H)
    b1 = (p["bih1"] + p["bhh1"]).reshape(1, 4 * H)

    blk = lambda w, k: w[:, k * H:(k + 1) * H]
    z_hh = jnp.zeros((H, H), jnp.float32)
    z_1h = jnp.zeros((1, H), jnp.float32)

    # Column blocks [i0, i1, f0, f1, g0, g1, o0, o1]; row blocks [h0 ; h1].
    top = jnp.concatenate(
        [c for k in range(4) for c in (blk(whh0_t, k), blk(wih1_t, k))], axis=1)
    bot = jnp.concatenate(
        [c for k in range(4) for c in (z_hh, blk(whh1_t, k))], axis=1)
    wbig = jnp.concatenate([top, bot], axis=0)                       # (2H, 8H)

    wih0w = jnp.concatenate(
        [c for k in range(4) for c in (blk(wih0_t, k), z_1h)], axis=1)  # (1, 8H)
    bw = jnp.concatenate(
        [c for k in range(4) for c in (blk(b0, k), blk(b1, k))], axis=1)  # (1, 8H)

    # ln2(ln1(x)) has no nonlinearity between them -> exact linear composition.
    wc = (p["w_ln2"] @ p["w_ln1"]).reshape(B, H)                     # (B, H)
    bhead = (p["w_ln2"] @ p["b_ln1"] + p["b_ln2"]).reshape(1, 1)     # (1, 1)

    return dict(wbig=wbig, wih0w=wih0w, bw=bw, wc=wc, bhead=bhead)


# ----------------------------------------------------------------------------
# Forward wrapper: a single fused pallas_call (only layout glue in plain JAX).
# ----------------------------------------------------------------------------
def net_forward(input_seq, pk):
    N = input_seq.shape[0]
    H = pk["wbig"].shape[0] // 2
    B = DAYS_TRAIN
    # Matches `input_seq.view(len(input_seq), DAYS_TRAIN, -1)` fed to a
    # batch_first=False nn.LSTM: time-major (T=N, batch=B, input=1).
    # Kernel input is (B, T+1): T in the lane dim (one padded (8,128) tile),
    # plus one zero column so the last step's fused "layer-0 @ t+1" term has
    # an x value to read (its result is discarded).
    x_bt = input_seq.reshape(N, B).astype(jnp.float32).T             # (B, T)
    x_pad = jnp.concatenate([x_bt, jnp.zeros((B, 1), jnp.float32)], axis=1)
    npad = pl.cdiv(N, 128) * 128                                     # lane-dense out

    out_row = pl.pallas_call(
        functools.partial(_net_kernel, H=H, T=N, B=B, NPAD=npad),
        out_shape=jax.ShapeDtypeStruct((1, npad), jnp.float32),
        in_specs=[pl.BlockSpec(memory_space=pltpu.MemorySpace.VMEM)] * 6,
        out_specs=pl.BlockSpec(memory_space=pltpu.MemorySpace.VMEM),
    )(x_pad, pk["wbig"], pk["wih0w"], pk["bw"], pk["wc"], pk["bhead"])
    # NOTE: for large N switch the unrolled loop to lax.fori_loop(unroll=k);
    # to use both v7x TensorCores add a "parallel" grid axis over independent
    # sequences (the single recurrence itself is serial over T).
    return out_row[0, :N].reshape(N, 1)


# ----------------------------------------------------------------------------
# Pure-JAX reference (uses the original per-layer params and jax.nn.sigmoid).
# ----------------------------------------------------------------------------
def reference_forward(input_seq, p):
    N = input_seq.shape[0]
    H = p["whh0"].shape[1]
    B = DAYS_TRAIN
    xs = input_seq.reshape(N, B, 1).astype(jnp.float32)
    b0 = p["bih0"] + p["bhh0"]
    b1 = p["bih1"] + p["bhh1"]

    def cell(h, c, x_in, wih, whh, b):
        g = x_in @ wih.T + h @ whh.T + b
        i = jax.nn.sigmoid(g[:, :H])
        f = jax.nn.sigmoid(g[:, H:2 * H])
        gg = jnp.tanh(g[:, 2 * H:3 * H])
        o = jax.nn.sigmoid(g[:, 3 * H:])
        c = f * c + i * gg
        return o * jnp.tanh(c), c

    def step(carry, x_t):
        h0, c0, h1, c1 = carry
        h0, c0 = cell(h0, c0, x_t, p["wih0"], p["whh0"], b0)
        h1, c1 = cell(h1, c1, h0, p["wih1"], p["whh1"], b1)
        return (h0, c0, h1, c1), h1

    z = jnp.zeros((B, H), jnp.float32)
    _, hs = jax.lax.scan(step, (z, z, z, z), xs)                     # (N, B, H)
    flat = hs.reshape(N, B * H)
    pre = flat @ p["w_ln1"].T + p["b_ln1"]
    pre = pre @ p["w_ln2"].T + p["b_ln2"]
    return pre


if __name__ == "__main__":
    key = jax.random.PRNGKey(0)
    pkey, xkey = jax.random.split(key)

    H = 32                                  # small hidden size for the demo
    N = 8                                   # number of samples (LSTM seq len)
    raw = init_params(pkey, H)
    packed = pack_params(raw)
    input_seq = jax.random.normal(xkey, (N, DAYS_TRAIN), jnp.float32)

    out = jax.block_until_ready(net_forward(input_seq, packed))
    ref = jax.block_until_ready(reference_forward(input_seq, raw))

    assert out.shape == (N, 1)
    np.testing.assert_allclose(np.asarray(out), np.asarray(ref),
                               rtol=2e-3, atol=2e-3)
    print("KERNEL_OK")
</pallas_src>

<mosaic_0001>
module attributes {stable_mosaic.version = 11 : i64} {
  func.func @_net_kernel(%arg0: memref<5x9xf32, #tpu.memory_space<vmem>>, %arg1: memref<64x256xf32, #tpu.memory_space<vmem>>, %arg2: memref<1x256xf32, #tpu.memory_space<vmem>>, %arg3: memref<1x256xf32, #tpu.memory_space<vmem>>, %arg4: memref<5x32xf32, #tpu.memory_space<vmem>>, %arg5: memref<1x1xf32, #tpu.memory_space<vmem>>, %arg6: memref<1x128xf32, #tpu.memory_space<vmem>>) attributes {dimension_semantics = [], scalar_prefetch = 0 : i64, scratch_operands = 0 : i64, tpu.core_type = #tpu.core_type<tc>} {
    %0 = tpu.iota {dimensions = array<i32: 1>} : vector<5x256xi32>
    %c128_i32 = arith.constant 128 : i32
    %1 = vector.broadcast %c128_i32 : i32 to vector<5x256xi32>
    %2 = arith.cmpi sge, %0, %1 : vector<5x256xi32>
    %c192_i32 = arith.constant 192 : i32
    %3 = vector.broadcast %c192_i32 : i32 to vector<5x256xi32>
    %4 = arith.cmpi slt, %0, %3 : vector<5x256xi32>
    %5 = arith.andi %2, %4 : vector<5x256xi1>
    %6 = tpu.iota {dimensions = array<i32: 1>} : vector<5x64xi32>
    %c32_i32 = arith.constant 32 : i32
    %7 = vector.broadcast %c32_i32 : i32 to vector<5x64xi32>
    %8 = arith.cmpi slt, %6, %7 : vector<5x64xi32>
    %9 = tpu.iota {dimensions = array<i32: 1>} : vector<1x128xi32>
    %c0 = arith.constant 0 : index
    %c0_0 = arith.constant 0 : index
    %10 = vector.load %arg1[%c0, %c0_0] : memref<64x256xf32, #tpu.memory_space<vmem>>, vector<64x256xf32>
    %c0_1 = arith.constant 0 : index
    %c0_2 = arith.constant 0 : index
    %11 = vector.load %arg2[%c0_1, %c0_2] : memref<1x256xf32, #tpu.memory_space<vmem>>, vector<1x256xf32>
    %c0_3 = arith.constant 0 : index
    %c0_4 = arith.constant 0 : index
    %12 = vector.load %arg3[%c0_3, %c0_4] : memref<1x256xf32, #tpu.memory_space<vmem>>, vector<1x256xf32>
    %c0_5 = arith.constant 0 : index
    %c0_6 = arith.constant 0 : index
    %13 = vector.load %arg4[%c0_5, %c0_6] : memref<5x32xf32, #tpu.memory_space<vmem>>, vector<5x32xf32>
    %c0_7 = arith.constant 0 : index
    %c0_8 = arith.constant 0 : index
    %14 = vector.load %arg5[%c0_7, %c0_8] : memref<1x1xf32, #tpu.memory_space<vmem>>, vector<1x1xf32>
    %c0_9 = arith.constant 0 : index
    %c0_10 = arith.constant 0 : index
    %15 = vector.load %arg0[%c0_9, %c0_10] : memref<5x9xf32, #tpu.memory_space<vmem>>, vector<5x1xf32>
    %16 = vector.broadcast %15 : vector<5x1xf32> to vector<5x256xf32>
    %17 = vector.broadcast %11 : vector<1x256xf32> to vector<5x256xf32>
    %18 = arith.mulf %16, %17 : vector<5x256xf32>
    %19 = vector.broadcast %12 : vector<1x256xf32> to vector<5x256xf32>
    %20 = arith.addf %18, %19 : vector<5x256xf32>
    %cst = arith.constant 5.000000e-01 : f32
    %21 = vector.broadcast %cst : f32 to vector<5x256xf32>
    %22 = arith.mulf %21, %20 : vector<5x256xf32>
    %23 = arith.select %5, %20, %22 : vector<5x256xi1>, vector<5x256xf32>
    %24 = math.tanh %23 : vector<5x256xf32>
    %cst_11 = arith.constant 5.000000e-01 : f32
    %25 = vector.broadcast %cst_11 : f32 to vector<5x256xf32>
    %26 = arith.mulf %25, %24 : vector<5x256xf32>
    %cst_12 = arith.constant 5.000000e-01 : f32
    %27 = vector.broadcast %cst_12 : f32 to vector<5x256xf32>
    %28 = arith.addf %26, %27 : vector<5x256xf32>
    %29 = arith.select %5, %24, %28 : vector<5x256xi1>, vector<5x256xf32>
    %cst_13 = arith.constant 0.000000e+00 : f32
    %30 = vector.broadcast %cst_13 : f32 to vector<5x64xf32>
    %31 = vector.extract_strided_slice %29 {offsets = [0, 0], sizes = [5, 64], strides = [1, 1]} : vector<5x256xf32> to vector<5x64xf32>
    %32 = vector.extract_strided_slice %29 {offsets = [0, 64], sizes = [5, 64], strides = [1, 1]} : vector<5x256xf32> to vector<5x64xf32>
    %33 = vector.extract_strided_slice %29 {offsets = [0, 128], sizes = [5, 64], strides = [1, 1]} : vector<5x256xf32> to vector<5x64xf32>
    %34 = vector.extract_strided_slice %29 {offsets = [0, 192], sizes = [5, 64], strides = [1, 1]} : vector<5x256xf32> to vector<5x64xf32>
    %35 = arith.mulf %32, %30 : vector<5x64xf32>
    %36 = arith.mulf %31, %33 : vector<5x64xf32>
    %37 = arith.addf %35, %36 : vector<5x64xf32>
    %38 = math.tanh %37 : vector<5x64xf32>
    %39 = arith.mulf %34, %38 : vector<5x64xf32>
    %cst_14 = arith.constant 0.000000e+00 : f32
    %40 = vector.broadcast %cst_14 : f32 to vector<5x64xf32>
    %41 = arith.select %8, %37, %40 : vector<5x64xi1>, vector<5x64xf32>
    %cst_15 = arith.constant 0.000000e+00 : f32
    %42 = vector.broadcast %cst_15 : f32 to vector<5x64xf32>
    %43 = arith.select %8, %39, %42 : vector<5x64xi1>, vector<5x64xf32>
    %cst_16 = arith.constant 0.000000e+00 : f32
    %44 = vector.broadcast %cst_16 : f32 to vector<1x128xf32>
    %cst_17 = arith.constant dense<0.000000e+00> : vector<5x256xf32>
    %45 = tpu.matmul %43, %10, %cst_17 {dimension_numbers = #tpu.dot_dimension_numbers<[1], [0], [0], [1], [0, 0, 1, 1], [], []>} : vector<5x64xf32>, vector<64x256xf32>, vector<5x256xf32> -> vector<5x256xf32>
    %c0_18 = arith.constant 0 : index
    %c1 = arith.constant 1 : index
    %46 = vector.load %arg0[%c0_18, %c1] : memref<5x9xf32, #tpu.memory_space<vmem>>, vector<5x1xf32>
    %47 = vector.broadcast %46 : vector<5x1xf32> to vector<5x256xf32>
    %48 = vector.broadcast %11 : vector<1x256xf32> to vector<5x256xf32>
    %49 = arith.mulf %47, %48 : vector<5x256xf32>
    %50 = arith.addf %45, %49 : vector<5x256xf32>
    %51 = vector.broadcast %12 : vector<1x256xf32> to vector<5x256xf32>
    %52 = arith.addf %50, %51 : vector<5x256xf32>
    %cst_19 = arith.constant 5.000000e-01 : f32
    %53 = vector.broadcast %cst_19 : f32 to vector<5x256xf32>
    %54 = arith.mulf %53, %52 : vector<5x256xf32>
    %55 = arith.select %5, %52, %54 : vector<5x256xi1>, vector<5x256xf32>
    %56 = math.tanh %55 : vector<5x256xf32>
    %cst_20 = arith.constant 5.000000e-01 : f32
    %57 = vector.broadcast %cst_20 : f32 to vector<5x256xf32>
    %58 = arith.mulf %57, %56 : vector<5x256xf32>
    %cst_21 = arith.constant 5.000000e-01 : f32
    %59 = vector.broadcast %cst_21 : f32 to vector<5x256xf32>
    %60 = arith.addf %58, %59 : vector<5x256xf32>
    %61 = arith.select %5, %56, %60 : vector<5x256xi1>, vector<5x256xf32>
    %62 = vector.extract_strided_slice %61 {offsets = [0, 0], sizes = [5, 64], strides = [1, 1]} : vector<5x256xf32> to vector<5x64xf32>
    %63 = vector.extract_strided_slice %61 {offsets = [0, 64], sizes = [5, 64], strides = [1, 1]} : vector<5x256xf32> to vector<5x64xf32>
    %64 = vector.extract_strided_slice %61 {offsets = [0, 128], sizes = [5, 64], strides = [1, 1]} : vector<5x256xf32> to vector<5x64xf32>
    %65 = vector.extract_strided_slice %61 {offsets = [0, 192], sizes = [5, 64], strides = [1, 1]} : vector<5x256xf32> to vector<5x64xf32>
    %66 = arith.mulf %63, %41 : vector<5x64xf32>
    %67 = arith.mulf %62, %64 : vector<5x64xf32>
    %68 = arith.addf %66, %67 : vector<5x64xf32>
    %69 = math.tanh %68 : vector<5x64xf32>
    %70 = arith.mulf %65, %69 : vector<5x64xf32>
    %71 = vector.extract_strided_slice %70 {offsets = [0, 32], sizes = [5, 32], strides = [1, 1]} : vector<5x64xf32> to vector<5x32xf32>
    %72 = arith.mulf %71, %13 : vector<5x32xf32>
    %cst_22 = arith.constant dense<0.000000e+00> : vector<5xf32>
    %73 = vector.multi_reduction <add>, %72, %cst_22 [1] : vector<5x32xf32> to vector<5xf32>
    %74 = vector.shape_cast %73 : vector<5xf32> to vector<5x1xf32>
    %cst_23 = arith.constant dense<0.000000e+00> : vector<1xf32>
    %75 = vector.multi_reduction <add>, %74, %cst_23 [0] : vector<5x1xf32> to vector<1xf32>
    %76 = vector.shape_cast %75 : vector<1xf32> to vector<1x1xf32>
    %77 = arith.addf %76, %14 : vector<1x1xf32>
    %c0_i32 = arith.constant 0 : i32
    %78 = vector.broadcast %c0_i32 : i32 to vector<1x128xi32>
    %79 = arith.cmpi eq, %9, %78 : vector<1x128xi32>
    %80 = vector.shape_cast %77 : vector<1x1xf32> to vector<1x1xf32>
    %81 = vector.broadcast %80 : vector<1x1xf32> to vector<1x128xf32>
    %82 = arith.select %79, %81, %44 : vector<1x128xi1>, vector<1x128xf32>
    %cst_24 = arith.constant dense<0.000000e+00> : vector<5x256xf32>
    %83 = tpu.matmul %70, %10, %cst_24 {dimension_numbers = #tpu.dot_dimension_numbers<[1], [0], [0], [1], [0, 0, 1, 1], [], []>} : vector<5x64xf32>, vector<64x256xf32>, vector<5x256xf32> -> vector<5x256xf32>
    %c0_25 = arith.constant 0 : index
    %c2 = arith.constant 2 : index
    %84 = vector.load %arg0[%c0_25, %c2] : memref<5x9xf32, #tpu.memory_space<vmem>>, vector<5x1xf32>
    %85 = vector.broadcast %84 : vector<5x1xf32> to vector<5x256xf32>
    %86 = vector.broadcast %11 : vector<1x256xf32> to vector<5x256xf32>
    %87 = arith.mulf %85, %86 : vector<5x256xf32>
    %88 = arith.addf %83, %87 : vector<5x256xf32>
    %89 = vector.broadcast %12 : vector<1x256xf32> to vector<5x256xf32>
    %90 = arith.addf %88, %89 : vector<5x256xf32>
    %cst_26 = arith.constant 5.000000e-01 : f32
    %91 = vector.broadcast %cst_26 : f32 to vector<5x256xf32>
    %92 = arith.mulf %91, %90 : vector<5x256xf32>
    %93 = arith.select %5, %90, %92 : vector<5x256xi1>, vector<5x256xf32>
    %94 = math.tanh %93 : vector<5x256xf32>
    %cst_27 = arith.constant 5.000000e-01 : f32
    %95 = vector.broadcast %cst_27 : f32 to vector<5x256xf32>
    %96 = arith.mulf %95, %94 : vector<5x256xf32>
    %cst_28 = arith.constant 5.000000e-01 : f32
    %97 = vector.broadcast %cst_28 : f32 to vector<5x256xf32>
    %98 = arith.addf %96, %97 : vector<5x256xf32>
    %99 = arith.select %5, %94, %98 : vector<5x256xi1>, vector<5x256xf32>
    %100 = vector.extract_strided_slice %99 {offsets = [0, 0], sizes = [5, 64], strides = [1, 1]} : vector<5x256xf32> to vector<5x64xf32>
    %101 = vector.extract_strided_slice %99 {offsets = [0, 64], sizes = [5, 64], strides = [1, 1]} : vector<5x256xf32> to vector<5x64xf32>
    %102 = vector.extract_strided_slice %99 {offsets = [0, 128], sizes = [5, 64], strides = [1, 1]} : vector<5x256xf32> to vector<5x64xf32>
    %103 = vector.extract_strided_slice %99 {offsets = [0, 192], sizes = [5, 64], strides = [1, 1]} : vector<5x256xf32> to vector<5x64xf32>
    %104 = arith.mulf %101, %68 : vector<5x64xf32>
    %105 = arith.mulf %100, %102 : vector<5x64xf32>
    %106 = arith.addf %104, %105 : vector<5x64xf32>
    %107 = math.tanh %106 : vector<5x64xf32>
    %108 = arith.mulf %103, %107 : vector<5x64xf32>
    %109 = vector.extract_strided_slice %108 {offsets = [0, 32], sizes = [5, 32], strides = [1, 1]} : vector<5x64xf32> to vector<5x32xf32>
    %110 = arith.mulf %109, %13 : vector<5x32xf32>
    %cst_29 = arith.constant dense<0.000000e+00> : vector<5xf32>
    %111 = vector.multi_reduction <add>, %110, %cst_29 [1] : vector<5x32xf32> to vector<5xf32>
    %112 = vector.shape_cast %111 : vector<5xf32> to vector<5x1xf32>
    %cst_30 = arith.constant dense<0.000000e+00> : vector<1xf32>
    %113 = vector.multi_reduction <add>, %112, %cst_30 [0] : vector<5x1xf32> to vector<1xf32>
    %114 = vector.shape_cast %113 : vector<1xf32> to vector<1x1xf32>
    %115 = arith.addf %114, %14 : vector<1x1xf32>
    %c1_i32 = arith.constant 1 : i32
    %116 = vector.broadcast %c1_i32 : i32 to vector<1x128xi32>
    %117 = arith.cmpi eq, %9, %116 : vector<1x128xi32>
    %118 = vector.shape_cast %115 : vector<1x1xf32> to vector<1x1xf32>
    %119 = vector.broadcast %118 : vector<1x1xf32> to vector<1x128xf32>
    %120 = arith.select %117, %119, %82 : vector<1x128xi1>, vector<1x128xf32>
    %cst_31 = arith.constant dense<0.000000e+00> : vector<5x256xf32>
    %121 = tpu.matmul %108, %10, %cst_31 {dimension_numbers = #tpu.dot_dimension_numbers<[1], [0], [0], [1], [0, 0, 1, 1], [], []>} : vector<5x64xf32>, vector<64x256xf32>, vector<5x256xf32> -> vector<5x256xf32>
    %c0_32 = arith.constant 0 : index
    %c3 = arith.constant 3 : index
    %122 = vector.load %arg0[%c0_32, %c3] : memref<5x9xf32, #tpu.memory_space<vmem>>, vector<5x1xf32>
    %123 = vector.broadcast %122 : vector<5x1xf32> to vector<5x256xf32>
    %124 = vector.broadcast %11 : vector<1x256xf32> to vector<5x256xf32>
    %125 = arith.mulf %123, %124 : vector<5x256xf32>
    %126 = arith.addf %121, %125 : vector<5x256xf32>
    %127 = vector.broadcast %12 : vector<1x256xf32> to vector<5x256xf32>
    %128 = arith.addf %126, %127 : vector<5x256xf32>
    %cst_33 = arith.constant 5.000000e-01 : f32
    %129 = vector.broadcast %cst_33 : f32 to vector<5x256xf32>
    %130 = arith.mulf %129, %128 : vector<5x256xf32>
    %131 = arith.select %5, %128, %130 : vector<5x256xi1>, vector<5x256xf32>
    %132 = math.tanh %131 : vector<5x256xf32>
    %cst_34 = arith.constant 5.000000e-01 : f32
    %133 = vector.broadcast %cst_34 : f32 to vector<5x256xf32>
    %134 = arith.mulf %133, %132 : vector<5x256xf32>
    %cst_35 = arith.constant 5.000000e-01 : f32
    %135 = vector.broadcast %cst_35 : f32 to vector<5x256xf32>
    %136 = arith.addf %134, %135 : vector<5x256xf32>
    %137 = arith.select %5, %132, %136 : vector<5x256xi1>, vector<5x256xf32>
    %138 = vector.extract_strided_slice %137 {offsets = [0, 0], sizes = [5, 64], strides = [1, 1]} : vector<5x256xf32> to vector<5x64xf32>
    %139 = vector.extract_strided_slice %137 {offsets = [0, 64], sizes = [5, 64], strides = [1, 1]} : vector<5x256xf32> to vector<5x64xf32>
    %140 = vector.extract_strided_slice %137 {offsets = [0, 128], sizes = [5, 64], strides = [1, 1]} : vector<5x256xf32> to vector<5x64xf32>
    %141 = vector.extract_strided_slice %137 {offsets = [0, 192], sizes = [5, 64], strides = [1, 1]} : vector<5x256xf32> to vector<5x64xf32>
    %142 = arith.mulf %139, %106 : vector<5x64xf32>
    %143 = arith.mulf %138, %140 : vector<5x64xf32>
    %144 = arith.addf %142, %143 : vector<5x64xf32>
    %145 = math.tanh %144 : vector<5x64xf32>
    %146 = arith.mulf %141, %145 : vector<5x64xf32>
    %147 = vector.extract_strided_slice %146 {offsets = [0, 32], sizes = [5, 32], strides = [1, 1]} : vector<5x64xf32> to vector<5x32xf32>
    %148 = arith.mulf %147, %13 : vector<5x32xf32>
    %cst_36 = arith.constant dense<0.000000e+00> : vector<5xf32>
    %149 = vector.multi_reduction <add>, %148, %cst_36 [1] : vector<5x32xf32> to vector<5xf32>
    %150 = vector.shape_cast %149 : vector<5xf32> to vector<5x1xf32>
    %cst_37 = arith.constant dense<0.000000e+00> : vector<1xf32>
    %151 = vector.multi_reduction <add>, %150, %cst_37 [0] : vector<5x1xf32> to vector<1xf32>
    %152 = vector.shape_cast %151 : vector<1xf32> to vector<1x1xf32>
    %153 = arith.addf %152, %14 : vector<1x1xf32>
    %c2_i32 = arith.constant 2 : i32
    %154 = vector.broadcast %c2_i32 : i32 to vector<1x128xi32>
    %155 = arith.cmpi eq, %9, %154 : vector<1x128xi32>
    %156 = vector.shape_cast %153 : vector<1x1xf32> to vector<1x1xf32>
    %157 = vector.broadcast %156 : vector<1x1xf32> to vector<1x128xf32>
    %158 = arith.select %155, %157, %120 : vector<1x128xi1>, vector<1x128xf32>
    %cst_38 = arith.constant dense<0.000000e+00> : vector<5x256xf32>
    %159 = tpu.matmul %146, %10, %cst_38 {dimension_numbers = #tpu.dot_dimension_numbers<[1], [0], [0], [1], [0, 0, 1, 1], [], []>} : vector<5x64xf32>, vector<64x256xf32>, vector<5x256xf32> -> vector<5x256xf32>
    %c0_39 = arith.constant 0 : index
    %c4 = arith.constant 4 : index
    %160 = vector.load %arg0[%c0_39, %c4] : memref<5x9xf32, #tpu.memory_space<vmem>>, vector<5x1xf32>
    %161 = vector.broadcast %160 : vector<5x1xf32> to vector<5x256xf32>
    %162 = vector.broadcast %11 : vector<1x256xf32> to vector<5x256xf32>
    %163 = arith.mulf %161, %162 : vector<5x256xf32>
    %164 = arith.addf %159, %163 : vector<5x256xf32>
    %165 = vector.broadcast %12 : vector<1x256xf32> to vector<5x256xf32>
    %166 = arith.addf %164, %165 : vector<5x256xf32>
    %cst_40 = arith.constant 5.000000e-01 : f32
    %167 = vector.broadcast %cst_40 : f32 to vector<5x256xf32>
    %168 = arith.mulf %167, %166 : vector<5x256xf32>
    %169 = arith.select %5, %166, %168 : vector<5x256xi1>, vector<5x256xf32>
    %170 = math.tanh %169 : vector<5x256xf32>
    %cst_41 = arith.constant 5.000000e-01 : f32
    %171 = vector.broadcast %cst_41 : f32 to vector<5x256xf32>
    %172 = arith.mulf %171, %170 : vector<5x256xf32>
    %cst_42 = arith.constant 5.000000e-01 : f32
    %173 = vector.broadcast %cst_42 : f32 to vector<5x256xf32>
    %174 = arith.addf %172, %173 : vector<5x256xf32>
    %175 = arith.select %5, %170, %174 : vector<5x256xi1>, vector<5x256xf32>
    %176 = vector.extract_strided_slice %175 {offsets = [0, 0], sizes = [5, 64], strides = [1, 1]} : vector<5x256xf32> to vector<5x64xf32>
    %177 = vector.extract_strided_slice %175 {offsets = [0, 64], sizes = [5, 64], strides = [1, 1]} : vector<5x256xf32> to vector<5x64xf32>
    %178 = vector.extract_strided_slice %175 {offsets = [0, 128], sizes = [5, 64], strides = [1, 1]} : vector<5x256xf32> to vector<5x64xf32>
    %179 = vector.extract_strided_slice %175 {offsets = [0, 192], sizes = [5, 64], strides = [1, 1]} : vector<5x256xf32> to vector<5x64xf32>
    %180 = arith.mulf %177, %144 : vector<5x64xf32>
    %181 = arith.mulf %176, %178 : vector<5x64xf32>
    %182 = arith.addf %180, %181 : vector<5x64xf32>
    %183 = math.tanh %182 : vector<5x64xf32>
    %184 = arith.mulf %179, %183 : vector<5x64xf32>
    %185 = vector.extract_strided_slice %184 {offsets = [0, 32], sizes = [5, 32], strides = [1, 1]} : vector<5x64xf32> to vector<5x32xf32>
    %186 = arith.mulf %185, %13 : vector<5x32xf32>
    %cst_43 = arith.constant dense<0.000000e+00> : vector<5xf32>
    %187 = vector.multi_reduction <add>, %186, %cst_43 [1] : vector<5x32xf32> to vector<5xf32>
    %188 = vector.shape_cast %187 : vector<5xf32> to vector<5x1xf32>
    %cst_44 = arith.constant dense<0.000000e+00> : vector<1xf32>
    %189 = vector.multi_reduction <add>, %188, %cst_44 [0] : vector<5x1xf32> to vector<1xf32>
    %190 = vector.shape_cast %189 : vector<1xf32> to vector<1x1xf32>
    %191 = arith.addf %190, %14 : vector<1x1xf32>
    %c3_i32 = arith.constant 3 : i32
    %192 = vector.broadcast %c3_i32 : i32 to vector<1x128xi32>
    %193 = arith.cmpi eq, %9, %192 : vector<1x128xi32>
    %194 = vector.shape_cast %191 : vector<1x1xf32> to vector<1x1xf32>
    %195 = vector.broadcast %194 : vector<1x1xf32> to vector<1x128xf32>
    %196 = arith.select %193, %195, %158 : vector<1x128xi1>, vector<1x128xf32>
    %cst_45 = arith.constant dense<0.000000e+00> : vector<5x256xf32>
    %197 = tpu.matmul %184, %10, %cst_45 {dimension_numbers = #tpu.dot_dimension_numbers<[1], [0], [0], [1], [0, 0, 1, 1], [], []>} : vector<5x64xf32>, vector<64x256xf32>, vector<5x256xf32> -> vector<5x256xf32>
    %c0_46 = arith.constant 0 : index
    %c5 = arith.constant 5 : index
    %198 = vector.load %arg0[%c0_46, %c5] : memref<5x9xf32, #tpu.memory_space<vmem>>, vector<5x1xf32>
    %199 = vector.broadcast %198 : vector<5x1xf32> to vector<5x256xf32>
    %200 = vector.broadcast %11 : vector<1x256xf32> to vector<5x256xf32>
    %201 = arith.mulf %199, %200 : vector<5x256xf32>
    %202 = arith.addf %197, %201 : vector<5x256xf32>
    %203 = vector.broadcast %12 : vector<1x256xf32> to vector<5x256xf32>
    %204 = arith.addf %202, %203 : vector<5x256xf32>
    %cst_47 = arith.constant 5.000000e-01 : f32
    %205 = vector.broadcast %cst_47 : f32 to vector<5x256xf32>
    %206 = arith.mulf %205, %204 : vector<5x256xf32>
    %207 = arith.select %5, %204, %206 : vector<5x256xi1>, vector<5x256xf32>
    %208 = math.tanh %207 : vector<5x256xf32>
    %cst_48 = arith.constant 5.000000e-01 : f32
    %209 = vector.broadcast %cst_48 : f32 to vector<5x256xf32>
    %210 = arith.mulf %209, %208 : vector<5x256xf32>
    %cst_49 = arith.constant 5.000000e-01 : f32
    %211 = vector.broadcast %cst_49 : f32 to vector<5x256xf32>
    %212 = arith.addf %210, %211 : vector<5x256xf32>
    %213 = arith.select %5, %208, %212 : vector<5x256xi1>, vector<5x256xf32>
    %214 = vector.extract_strided_slice %213 {offsets = [0, 0], sizes = [5, 64], strides = [1, 1]} : vector<5x256xf32> to vector<5x64xf32>
    %215 = vector.extract_strided_slice %213 {offsets = [0, 64], sizes = [5, 64], strides = [1, 1]} : vector<5x256xf32> to vector<5x64xf32>
    %216 = vector.extract_strided_slice %213 {offsets = [0, 128], sizes = [5, 64], strides = [1, 1]} : vector<5x256xf32> to vector<5x64xf32>
    %217 = vector.extract_strided_slice %213 {offsets = [0, 192], sizes = [5, 64], strides = [1, 1]} : vector<5x256xf32> to vector<5x64xf32>
    %218 = arith.mulf %215, %182 : vector<5x64xf32>
    %219 = arith.mulf %214, %216 : vector<5x64xf32>
    %220 = arith.addf %218, %219 : vector<5x64xf32>
    %221 = math.tanh %220 : vector<5x64xf32>
    %222 = arith.mulf %217, %221 : vector<5x64xf32>
    %223 = vector.extract_strided_slice %222 {offsets = [0, 32], sizes = [5, 32], strides = [1, 1]} : vector<5x64xf32> to vector<5x32xf32>
    %224 = arith.mulf %223, %13 : vector<5x32xf32>
    %cst_50 = arith.constant dense<0.000000e+00> : vector<5xf32>
    %225 = vector.multi_reduction <add>, %224, %cst_50 [1] : vector<5x32xf32> to vector<5xf32>
    %226 = vector.shape_cast %225 : vector<5xf32> to vector<5x1xf32>
    %cst_51 = arith.constant dense<0.000000e+00> : vector<1xf32>
    %227 = vector.multi_reduction <add>, %226, %cst_51 [0] : vector<5x1xf32> to vector<1xf32>
    %228 = vector.shape_cast %227 : vector<1xf32> to vector<1x1xf32>
    %229 = arith.addf %228, %14 : vector<1x1xf32>
    %c4_i32 = arith.constant 4 : i32
    %230 = vector.broadcast %c4_i32 : i32 to vector<1x128xi32>
    %231 = arith.cmpi eq, %9, %230 : vector<1x128xi32>
    %232 = vector.shape_cast %229 : vector<1x1xf32> to vector<1x1xf32>
    %233 = vector.broadcast %232 : vector<1x1xf32> to vector<1x128xf32>
    %234 = arith.select %231, %233, %196 : vector<1x128xi1>, vector<1x128xf32>
    %cst_52 = arith.constant dense<0.000000e+00> : vector<5x256xf32>
    %235 = tpu.matmul %222, %10, %cst_52 {dimension_numbers = #tpu.dot_dimension_numbers<[1], [0], [0], [1], [0, 0, 1, 1], [], []>} : vector<5x64xf32>, vector<64x256xf32>, vector<5x256xf32> -> vector<5x256xf32>
    %c0_53 = arith.constant 0 : index
    %c6 = arith.constant 6 : index
    %236 = vector.load %arg0[%c0_53, %c6] : memref<5x9xf32, #tpu.memory_space<vmem>>, vector<5x1xf32>
    %237 = vector.broadcast %236 : vector<5x1xf32> to vector<5x256xf32>
    %238 = vector.broadcast %11 : vector<1x256xf32> to vector<5x256xf32>
    %239 = arith.mulf %237, %238 : vector<5x256xf32>
    %240 = arith.addf %235, %239 : vector<5x256xf32>
    %241 = vector.broadcast %12 : vector<1x256xf32> to vector<5x256xf32>
    %242 = arith.addf %240, %241 : vector<5x256xf32>
    %cst_54 = arith.constant 5.000000e-01 : f32
    %243 = vector.broadcast %cst_54 : f32 to vector<5x256xf32>
    %244 = arith.mulf %243, %242 : vector<5x256xf32>
    %245 = arith.select %5, %242, %244 : vector<5x256xi1>, vector<5x256xf32>
    %246 = math.tanh %245 : vector<5x256xf32>
    %cst_55 = arith.constant 5.000000e-01 : f32
    %247 = vector.broadcast %cst_55 : f32 to vector<5x256xf32>
    %248 = arith.mulf %247, %246 : vector<5x256xf32>
    %cst_56 = arith.constant 5.000000e-01 : f32
    %249 = vector.broadcast %cst_56 : f32 to vector<5x256xf32>
    %250 = arith.addf %248, %249 : vector<5x256xf32>
    %251 = arith.select %5, %246, %250 : vector<5x256xi1>, vector<5x256xf32>
    %252 = vector.extract_strided_slice %251 {offsets = [0, 0], sizes = [5, 64], strides = [1, 1]} : vector<5x256xf32> to vector<5x64xf32>
    %253 = vector.extract_strided_slice %251 {offsets = [0, 64], sizes = [5, 64], strides = [1, 1]} : vector<5x256xf32> to vector<5x64xf32>
    %254 = vector.extract_strided_slice %251 {offsets = [0, 128], sizes = [5, 64], strides = [1, 1]} : vector<5x256xf32> to vector<5x64xf32>
    %255 = vector.extract_strided_slice %251 {offsets = [0, 192], sizes = [5, 64], strides = [1, 1]} : vector<5x256xf32> to vector<5x64xf32>
    %256 = arith.mulf %253, %220 : vector<5x64xf32>
    %257 = arith.mulf %252, %254 : vector<5x64xf32>
    %258 = arith.addf %256, %257 : vector<5x64xf32>
    %259 = math.tanh %258 : vector<5x64xf32>
    %260 = arith.mulf %255, %259 : vector<5x64xf32>
    %261 = vector.extract_strided_slice %260 {offsets = [0, 32], sizes = [5, 32], strides = [1, 1]} : vector<5x64xf32> to vector<5x32xf32>
    %262 = arith.mulf %261, %13 : vector<5x32xf32>
    %cst_57 = arith.constant dense<0.000000e+00> : vector<5xf32>
    %263 = vector.multi_reduction <add>, %262, %cst_57 [1] : vector<5x32xf32> to vector<5xf32>
    %264 = vector.shape_cast %263 : vector<5xf32> to vector<5x1xf32>
    %cst_58 = arith.constant dense<0.000000e+00> : vector<1xf32>
    %265 = vector.multi_reduction <add>, %264, %cst_58 [0] : vector<5x1xf32> to vector<1xf32>
    %266 = vector.shape_cast %265 : vector<1xf32> to vector<1x1xf32>
    %267 = arith.addf %266, %14 : vector<1x1xf32>
    %c5_i32 = arith.constant 5 : i32
    %268 = vector.broadcast %c5_i32 : i32 to vector<1x128xi32>
    %269 = arith.cmpi eq, %9, %268 : vector<1x128xi32>
    %270 = vector.shape_cast %267 : vector<1x1xf32> to vector<1x1xf32>
    %271 = vector.broadcast %270 : vector<1x1xf32> to vector<1x128xf32>
    %272 = arith.select %269, %271, %234 : vector<1x128xi1>, vector<1x128xf32>
    %cst_59 = arith.constant dense<0.000000e+00> : vector<5x256xf32>
    %273 = tpu.matmul %260, %10, %cst_59 {dimension_numbers = #tpu.dot_dimension_numbers<[1], [0], [0], [1], [0, 0, 1, 1], [], []>} : vector<5x64xf32>, vector<64x256xf32>, vector<5x256xf32> -> vector<5x256xf32>
    %c0_60 = arith.constant 0 : index
    %c7 = arith.constant 7 : index
    %274 = vector.load %arg0[%c0_60, %c7] : memref<5x9xf32, #tpu.memory_space<vmem>>, vector<5x1xf32>
    %275 = vector.broadcast %274 : vector<5x1xf32> to vector<5x256xf32>
    %276 = vector.broadcast %11 : vector<1x256xf32> to vector<5x256xf32>
    %277 = arith.mulf %275, %276 : vector<5x256xf32>
    %278 = arith.addf %273, %277 : vector<5x256xf32>
    %279 = vector.broadcast %12 : vector<1x256xf32> to vector<5x256xf32>
    %280 = arith.addf %278, %279 : vector<5x256xf32>
    %cst_61 = arith.constant 5.000000e-01 : f32
    %281 = vector.broadcast %cst_61 : f32 to vector<5x256xf32>
    %282 = arith.mulf %281, %280 : vector<5x256xf32>
    %283 = arith.select %5, %280, %282 : vector<5x256xi1>, vector<5x256xf32>
    %284 = math.tanh %283 : vector<5x256xf32>
    %cst_62 = arith.constant 5.000000e-01 : f32
    %285 = vector.broadcast %cst_62 : f32 to vector<5x256xf32>
    %286 = arith.mulf %285, %284 : vector<5x256xf32>
    %cst_63 = arith.constant 5.000000e-01 : f32
    %287 = vector.broadcast %cst_63 : f32 to vector<5x256xf32>
    %288 = arith.addf %286, %287 : vector<5x256xf32>
    %289 = arith.select %5, %284, %288 : vector<5x256xi1>, vector<5x256xf32>
    %290 = vector.extract_strided_slice %289 {offsets = [0, 0], sizes = [5, 64], strides = [1, 1]} : vector<5x256xf32> to vector<5x64xf32>
    %291 = vector.extract_strided_slice %289 {offsets = [0, 64], sizes = [5, 64], strides = [1, 1]} : vector<5x256xf32> to vector<5x64xf32>
    %292 = vector.extract_strided_slice %289 {offsets = [0, 128], sizes = [5, 64], strides = [1, 1]} : vector<5x256xf32> to vector<5x64xf32>
    %293 = vector.extract_strided_slice %289 {offsets = [0, 192], sizes = [5, 64], strides = [1, 1]} : vector<5x256xf32> to vector<5x64xf32>
    %294 = arith.mulf %291, %258 : vector<5x64xf32>
    %295 = arith.mulf %290, %292 : vector<5x64xf32>
    %296 = arith.addf %294, %295 : vector<5x64xf32>
    %297 = math.tanh %296 : vector<5x64xf32>
    %298 = arith.mulf %293, %297 : vector<5x64xf32>
    %299 = vector.extract_strided_slice %298 {offsets = [0, 32], sizes = [5, 32], strides = [1, 1]} : vector<5x64xf32> to vector<5x32xf32>
    %300 = arith.mulf %299, %13 : vector<5x32xf32>
    %cst_64 = arith.constant dense<0.000000e+00> : vector<5xf32>
    %301 = vector.multi_reduction <add>, %300, %cst_64 [1] : vector<5x32xf32> to vector<5xf32>
    %302 = vector.shape_cast %301 : vector<5xf32> to vector<5x1xf32>
    %cst_65 = arith.constant dense<0.000000e+00> : vector<1xf32>
    %303 = vector.multi_reduction <add>, %302, %cst_65 [0] : vector<5x1xf32> to vector<1xf32>
    %304 = vector.shape_cast %303 : vector<1xf32> to vector<1x1xf32>
    %305 = arith.addf %304, %14 : vector<1x1xf32>
    %c6_i32 = arith.constant 6 : i32
    %306 = vector.broadcast %c6_i32 : i32 to vector<1x128xi32>
    %307 = arith.cmpi eq, %9, %306 : vector<1x128xi32>
    %308 = vector.shape_cast %305 : vector<1x1xf32> to vector<1x1xf32>
    %309 = vector.broadcast %308 : vector<1x1xf32> to vector<1x128xf32>
    %310 = arith.select %307, %309, %272 : vector<1x128xi1>, vector<1x128xf32>
    %cst_66 = arith.constant dense<0.000000e+00> : vector<5x256xf32>
    %311 = tpu.matmul %298, %10, %cst_66 {dimension_numbers = #tpu.dot_dimension_numbers<[1], [0], [0], [1], [0, 0, 1, 1], [], []>} : vector<5x64xf32>, vector<64x256xf32>, vector<5x256xf32> -> vector<5x256xf32>
    %c0_67 = arith.constant 0 : index
    %c8 = arith.constant 8 : index
    %312 = vector.load %arg0[%c0_67, %c8] : memref<5x9xf32, #tpu.memory_space<vmem>>, vector<5x1xf32>
    %313 = vector.broadcast %312 : vector<5x1xf32> to vector<5x256xf32>
    %314 = vector.broadcast %11 : vector<1x256xf32> to vector<5x256xf32>
    %315 = arith.mulf %313, %314 : vector<5x256xf32>
    %316 = arith.addf %311, %315 : vector<5x256xf32>
    %317 = vector.broadcast %12 : vector<1x256xf32> to vector<5x256xf32>
    %318 = arith.addf %316, %317 : vector<5x256xf32>
    %cst_68 = arith.constant 5.000000e-01 : f32
    %319 = vector.broadcast %cst_68 : f32 to vector<5x256xf32>
    %320 = arith.mulf %319, %318 : vector<5x256xf32>
    %321 = arith.select %5, %318, %320 : vector<5x256xi1>, vector<5x256xf32>
    %322 = math.tanh %321 : vector<5x256xf32>
    %cst_69 = arith.constant 5.000000e-01 : f32
    %323 = vector.broadcast %cst_69 : f32 to vector<5x256xf32>
    %324 = arith.mulf %323, %322 : vector<5x256xf32>
    %cst_70 = arith.constant 5.000000e-01 : f32
    %325 = vector.broadcast %cst_70 : f32 to vector<5x256xf32>
    %326 = arith.addf %324, %325 : vector<5x256xf32>
    %327 = arith.select %5, %322, %326 : vector<5x256xi1>, vector<5x256xf32>
    %328 = vector.extract_strided_slice %327 {offsets = [0, 0], sizes = [5, 64], strides = [1, 1]} : vector<5x256xf32> to vector<5x64xf32>
    %329 = vector.extract_strided_slice %327 {offsets = [0, 64], sizes = [5, 64], strides = [1, 1]} : vector<5x256xf32> to vector<5x64xf32>
    %330 = vector.extract_strided_slice %327 {offsets = [0, 128], sizes = [5, 64], strides = [1, 1]} : vector<5x256xf32> to vector<5x64xf32>
    %331 = vector.extract_strided_slice %327 {offsets = [0, 192], sizes = [5, 64], strides = [1, 1]} : vector<5x256xf32> to vector<5x64xf32>
    %332 = arith.mulf %329, %296 : vector<5x64xf32>
    %333 = arith.mulf %328, %330 : vector<5x64xf32>
    %334 = arith.addf %332, %333 : vector<5x64xf32>
    %335 = math.tanh %334 : vector<5x64xf32>
    %336 = arith.mulf %331, %335 : vector<5x64xf32>
    %337 = vector.extract_strided_slice %336 {offsets = [0, 32], sizes = [5, 32], strides = [1, 1]} : vector<5x64xf32> to vector<5x32xf32>
    %338 = arith.mulf %337, %13 : vector<5x32xf32>
    %cst_71 = arith.constant dense<0.000000e+00> : vector<5xf32>
    %339 = vector.multi_reduction <add>, %338, %cst_71 [1] : vector<5x32xf32> to vector<5xf32>
    %340 = vector.shape_cast %339 : vector<5xf32> to vector<5x1xf32>
    %cst_72 = arith.constant dense<0.000000e+00> : vector<1xf32>
    %341 = vector.multi_reduction <add>, %340, %cst_72 [0] : vector<5x1xf32> to vector<1xf32>
    %342 = vector.shape_cast %341 : vector<1xf32> to vector<1x1xf32>
    %343 = arith.addf %342, %14 : vector<1x1xf32>
    %c7_i32 = arith.constant 7 : i32
    %344 = vector.broadcast %c7_i32 : i32 to vector<1x128xi32>
    %345 = arith.cmpi eq, %9, %344 : vector<1x128xi32>
    %346 = vector.shape_cast %343 : vector<1x1xf32> to vector<1x1xf32>
    %347 = vector.broadcast %346 : vector<1x1xf32> to vector<1x128xf32>
    %348 = arith.select %345, %347, %310 : vector<1x128xi1>, vector<1x128xf32>
    %c0_73 = arith.constant 0 : index
    %c0_74 = arith.constant 0 : index
    %349 = vector.load %arg6[%c0_73, %c0_74] : memref<1x128xf32, #tpu.memory_space<vmem>>, vector<1x128xf32>
    tpu.vector_store %arg6[%c0_73, %c0_74], %348 {strides = array<i32>} : memref<1x128xf32, #tpu.memory_space<vmem>>, vector<1x128xf32>,
    return
  }
}

</mosaic_0001>

<llo_original>
// kernel: tpu_custom_call.1
$region0: #{tpu_custom_call.1}
  #allocation0 [shape = 'u32[]', space=smem, size = 0x4, offset = 0x4, fixed_abs, tag = 'smem constant byte address 0x4 - core index']
  #allocation1 [shape = 'u32[144,128]{1,0:T(1,128)}', space=vmem, size = 0x12000, scoped, tag = 'internal scratch']
  #allocation2 [shape = 'f32[1,1]{1,0:T(1,128)S(1)}', space=vmem, size = 0x200, scoped, tag = 'scoped memory for tpu_custom_call.1']
  %s0 = inlined_call_operand.hbm [shape: f32[5,9], index: 0, kind: input, shape index: {}]
  %s1 = inlined_call_operand.hbm [shape: f32[64,256], index: 1, kind: input, shape index: {}]
  %s2 = inlined_call_operand.vmem [shape: f32[1,256], index: 2, kind: input, shape index: {}]
  %s3 = inlined_call_operand.vmem [shape: f32[1,256], index: 3, kind: input, shape index: {}]
  %s4 = inlined_call_operand.vmem [shape: f32[5,32], index: 4, kind: input, shape index: {}]
  %s5 = inlined_call_operand.<no memory space> [shape: f32[1,1], index: 5, kind: input, shape index: {}]
  %s6 = inlined_call_operand.hbm [shape: f32[1,128], index: 6, kind: output, shape index: {}]
  %s7 = sld [smem:[#allocation0]]
  $region42: #{tpu_custom_call.1} parent=0
    _
  %s9 = ssub.s32 1, %s7
  %s10 = scalar_select 0, %s9, %s7
  %v11 = vstv %s5
  %12 = vst [vmem:[#allocation2] sm:$0x1] %v11
  $region1: #{tpu_custom_call.1} parent=0
    #allocation3 [shape = 'u8[4096]{0}', space=vmem, size = 0x1000, scoped, tag = 'input window, operand 0, single buffered']
    #allocation4 [shape = 's32[1]{0}', space=sflag, size = 0x4, scoped, tag = 'scoped memory for tpu_custom_call.1']
    #allocation5 [shape = 's32[1]{0}', space=sflag, size = 0x4, scoped, tag = 'scoped memory for tpu_custom_call.1']
    #allocation6 [shape = 'u8[65536]{0}', space=vmem, size = 0x10000, scoped, tag = 'input window, operand 1, single buffered']
    #allocation7 [shape = 's32[1]{0}', space=sflag, size = 0x4, scoped, tag = 'scoped memory for tpu_custom_call.1']
    #allocation8 [shape = 'u8[512]{0}', space=vmem, size = 0x400, scoped, tag = 'output window, operand 0, single buffered']
    %13 = vsyncpa [#allocation4], 0
    %14 = vsyncpa [#allocation7], 0
    %15 = vsyncpa [#allocation5], 0
    // Predicated region
    $region2: #{tpu_custom_call.1} parent=1 // pred_check
      _
    $region3: #{tpu_custom_call.1} parent=1 // pred_check_branch
      %17 = sbr.rel (0) target = $region5
    $region4: #{tpu_custom_call.1} parent=1 // pred_region
      %s19 = ssub.s32 128, 128
      %20 = vsyncadd [#allocation4], %s19
      %s22 = sshll.u32 [#allocation3], 4
      %s23 = int_to_ptr.vmem [resolvable:$true] %s22
      %25 = dma.hbm_to_vmem [thread:$0]  %s0, 128, %s23, [#allocation4]
    $region5: #{tpu_custom_call.1} parent=1 // pred_fallthru
      _
    // Predicated region
    $region6: #{tpu_custom_call.1} parent=1 // pred_check
      _
    $region7: #{tpu_custom_call.1} parent=1 // pred_check_branch
      %27 = sbr.rel (0) target = $region9
    $region8: #{tpu_custom_call.1} parent=1 // pred_region
      %s29 = ssub.s32 2048, 2048
      %30 = vsyncadd [#allocation7], %s29
      %s31 = sshll.u32 [#allocation6], 4
      %s32 = int_to_ptr.vmem [resolvable:$true] %s31
      %37 = dma.hbm_to_vmem [thread:$0]  %s1, 2048, %s32, [#allocation7], 256, 256, 16
    $region9: #{tpu_custom_call.1} parent=1 // pred_fallthru
      _
    // Predicated region
    $region10: #{tpu_custom_call.1} parent=1 // pred_check
      _
    $region11: #{tpu_custom_call.1} parent=1 // pred_check_branch
      %39 = sbr.rel (0) target = $region13
    $region12: #{tpu_custom_call.1} parent=1 // pred_region
      _
    $region13: #{tpu_custom_call.1} parent=1 // pred_fallthru
      _
    // Predicated region
    $region14: #{tpu_custom_call.1} parent=1 // pred_check
      _
    $region15: #{tpu_custom_call.1} parent=1 // pred_check_branch
      %41 = sbr.rel (0) target = $region17
    $region16: #{tpu_custom_call.1} parent=1 // pred_region
      _
    $region17: #{tpu_custom_call.1} parent=1 // pred_fallthru
      _
    // Predicated region
    $region18: #{tpu_custom_call.1} parent=1 // pred_check
      _
    $region19: #{tpu_custom_call.1} parent=1 // pred_check_branch
      %43 = sbr.rel (0) target = $region21
    $region20: #{tpu_custom_call.1} parent=1 // pred_region
      _
    $region21: #{tpu_custom_call.1} parent=1 // pred_fallthru
      _
    // Predicated region
    $region22: #{tpu_custom_call.1} parent=1 // pred_check
      _
    $region23: #{tpu_custom_call.1} parent=1 // pred_check_branch
      %45 = sbr.rel (0) target = $region25
    $region24: #{tpu_custom_call.1} parent=1 // pred_region
      _
    $region25: #{tpu_custom_call.1} parent=1 // pred_fallthru
      _
    // Predicated region
    $region26: #{tpu_custom_call.1} parent=1 // pred_check
      _
    $region27: #{tpu_custom_call.1} parent=1 // pred_check_branch
      %47 = sbr.rel (0) target = $region29
    $region28: #{tpu_custom_call.1} parent=1 // pred_region
      %48 = dma.done [#allocation4], 128
    $region29: #{tpu_custom_call.1} parent=1 // pred_fallthru
      _
    // Predicated region
    $region30: #{tpu_custom_call.1} parent=1 // pred_check
      _
    $region31: #{tpu_custom_call.1} parent=1 // pred_check_branch
      %50 = sbr.rel (0) target = $region33
    $region32: #{tpu_custom_call.1} parent=1 // pred_region
      %51 = dma.done [#allocation7], 2048
    $region33: #{tpu_custom_call.1} parent=1 // pred_fallthru
      _
    %v52 = vlaneseq
    %v53 = vand.u32 %v52, 127
    %v54 = vadd.s32 %v53, 128
    %vm55 = vcmp.ge.s32.totalorder %v53, 128
    %vm56 = vcmp.ge.s32.totalorder %v54, 128
    %vm57 = vcmp.lt.s32.totalorder %v53, 192
    %vm58 = vcmp.lt.s32.totalorder %v54, 192
    %vm59 = vmand %vm55, %vm57
    %vm60 = vmand %vm56, %vm58
    %vm61 = vcmp.lt.s32.totalorder %v53, 32
    %v62 = vld [vmem:[#allocation6] sm:$0xff]
    %v63 = vld [vmem:[#allocation6 + $0x8] sm:$0xff]
    %v64 = vld [vmem:[#allocation6 + $0x10] sm:$0xff]
    %v65 = vld [vmem:[#allocation6 + $0x18] sm:$0xff]
    %v66 = vld [vmem:[#allocation6 + $0x20] sm:$0xff]
    %v67 = vld [vmem:[#allocation6 + $0x28] sm:$0xff]
    %v68 = vld [vmem:[#allocation6 + $0x30] sm:$0xff]
    %v69 = vld [vmem:[#allocation6 + $0x38] sm:$0xff]
    %v70 = vld [vmem:[#allocation6 + $0x40] sm:$0xff]
    %v71 = vld [vmem:[#allocation6 + $0x48] sm:$0xff]
    %v72 = vld [vmem:[#allocation6 + $0x50] sm:$0xff]
    %v73 = vld [vmem:[#allocation6 + $0x58] sm:$0xff]
    %v74 = vld [vmem:[#allocation6 + $0x60] sm:$0xff]
    %v75 = vld [vmem:[#allocation6 + $0x68] sm:$0xff]
    %v76 = vld [vmem:[#allocation6 + $0x70] sm:$0xff]
    %v77 = vld [vmem:[#allocation6 + $0x78] sm:$0xff]
    %v78 = vld [vmem:[%s2] sm:$0x3]
    %v79 = vld [vmem:[%s3] sm:$0x3]
    %v80 = vld [vmem:[%s4] sm:$0x1f]
    %v81 = vld [vmem:[#allocation2] sm:$0x1]
    %v82 = vld [vmem:[#allocation3] sm:$0x1f]
    %84 = vset.pattern.permute.xlu0 0
    %85 = vperm.xlu0 %84, %v82
    %v86 = vpop.permute.xlu0 %85
    %v89 = vlaneseq
    %v90 = vshrl.u32 %v89, 7
    %v91 = vsub.s32 0, %v90
    %v92 = vrot.slane %v78, %v91
    %v93 = vlaneseq
    %v94 = vshrl.u32 %v93, 7
    %v95 = vsub.s32 1, %v94
    %v96 = vrot.slane %v78, %v95
    %v99 = vmul.f32 %v86, %v92
    %v100 = vmul.f32 %v86, %v96
    %v102 = vlaneseq
    %v103 = vshrl.u32 %v102, 7
    %v104 = vsub.s32 0, %v103
    %v105 = vrot.slane %v79, %v104
    %v106 = vlaneseq
    %v107 = vshrl.u32 %v106, 7
    %v108 = vsub.s32 1, %v107
    %v109 = vrot.slane %v79, %v108
    %v112 = vadd.f32 %v99, %v105
    %v113 = vadd.f32 %v100, %v109
    %v114 = vmul.f32 %v112, 0.5
    %v115 = vmul.f32 %v113, 0.5
    %v116 = vsel %vm59, %v112, %v114
    %v117 = vsel %vm60, %v113, %v115
    %v118 = vtanh.pop %v116
    %v119 = vtanh.pop %v117
    %v120 = vmul.f32 %v118, 0.5
    %v121 = vmul.f32 %v119, 0.5
    %v122 = vadd.f32 %v120, 0.5
    %v123 = vadd.f32 %v121, 0.5
    %v124 = vsel %vm59, %v118, %v122
    %v125 = vsel %vm60, %v119, %v123
    %v126 = vmul.f32 %v124, 0.0
    %v127 = vmul.f32 %v124, %v125
    %129 = vrot.lane.b32.xlu0 %v127, 64
    %v130 = vpop.permute.xlu0 %129
    %v132 = vadd.f32 %v126, %v130
    %v133 = vtanh.pop %v132
    %v134 = vmul.f32 %v125, %v133
    %136 = vrot.lane.b32.xlu0 %v132, 64
    %v137 = vpop.permute.xlu0 %136
    %v139 = vsel %vm61, %v137, 0.0
    %141 = vrot.lane.b32.xlu0 %v134, 64
    %v142 = vpop.permute.xlu0 %141
    %v144 = vsel %vm61, %v142, 0.0
    %145 = vset.pattern.permute.xlu0 1
    %146 = vperm.xlu0 %145, %v82
    %v147 = vpop.permute.xlu0 %146
    %v149 = vmul.f32 %v147, %v92
    %v150 = vmul.f32 %v147, %v96
    %vm151 = vcmask 523264
    %v153 = vsel %vm151, %v144, 0
    %155 = vmatprep.subr.mxu0 %v63
    %156 = vmatpush1.msra.mxu0 %v62
    %157 = vmatprep.subr.mxu0 %v65
    %158 = vmatpush1.msra.mxu0 %v64
    %159 = vmatprep.subr.mxu0 %v67
    %160 = vmatpush1.msra.mxu0 %v66
    %161 = vmatprep.subr.mxu0 %v69
    %162 = vmatpush1.msra.mxu0 %v68
    %163 = vmatprep.subr.mxu0 %v71
    %164 = vmatpush1.msra.mxu0 %v70
    %165 = vmatprep.subr.mxu0 %v73
    %166 = vmatpush1.msra.mxu0 %v72
    %167 = vmatprep.subr.mxu0 %v75
    %168 = vmatpush1.msra.mxu0 %v74
    %169 = vmatprep.subr.mxu0 %v77
    %170 = vmatpush1.msra.mxu0 %v76
    %171 = vmatprep.subr.mxu0 0.0
    %172 = vmatpush1.msra.mxu0 0.0
    %173 = vmatprep.subr.mxu0 0.0
    %174 = vmatpush1.msra.mxu0 0.0
    %175 = vmatprep.subr.mxu0 0.0
    %176 = vmatpush1.msra.mxu0 0.0
    %177 = vmatprep.subr.mxu0 0.0
    %178 = vmatpush1.msra.mxu0 0.0
    %179 = vmatprep.subr.mxu0 0.0
    %180 = vmatpush1.msra.mxu0 0.0
    %181 = vmatprep.subr.mxu0 0.0
    %182 = vmatpush1.msra.mxu0 0.0
    %183 = vmatprep.subr.mxu0 0.0
    %184 = vmatpush1.msra.mxu0 0.0
    %185 = vmatprep.subr.mxu0 0.0
    %186 = vmatpush1.msra.mxu0 0.0
    %187 = vmatprep.subr.mxu0 0.0
    %188 = vmatpush1.msra.mxu0 0.0
    %189 = vmatprep.subr.mxu0 0.0
    %190 = vmatpush1.msra.mxu0 0.0
    %191 = vmatprep.subr.mxu0 0.0
    %192 = vmatpush1.msra.mxu0 0.0
    %193 = vmatprep.subr.mxu0 0.0
    %194 = vmatpush1.msra.mxu0 0.0
    %195 = vmatprep.subr.mxu0 0.0
    %196 = vmatpush1.msra.mxu0 0.0
    %197 = vmatprep.subr.mxu0 0.0
    %198 = vmatpush1.msra.mxu0 0.0
    %199 = vmatprep.subr.mxu0 0.0
    %200 = vmatpush1.msra.mxu0 0.0
    %201 = vmatprep.subr.mxu0 0.0
    %202 = vmatpush1.msra.mxu0 0.0
    %203 = vmatprep.subr.mxu0 0.0
    %204 = vmatpush1.msra.mxu0 0.0
    %205 = vmatprep.subr.mxu0 0.0
    %206 = vmatpush1.msra.mxu0 0.0
    %207 = vmatprep.subr.mxu0 0.0
    %208 = vmatpush1.msra.mxu0 0.0
    %209 = vmatprep.subr.mxu0 0.0
    %210 = vmatpush1.msra.mxu0 0.0
    %211 = vmatprep.subr.mxu0 0.0
    %212 = vmatpush1.msra.mxu0 0.0
    %213 = vmatprep.subr.mxu0 0.0
    %214 = vmatpush1.msra.mxu0 0.0
    %215 = vmatprep.subr.mxu0 0.0
    %216 = vmatpush1.msra.mxu0 0.0
    %217 = vmatprep.subr.mxu0 0.0
    %218 = vmatpush1.msra.mxu0 0.0
    %219 = vmatprep.mubr.f32.mxu0 0.0
    %220 = vmatmul.mubr.f32.gmra.mrb[0].mxu0 %v153
    %v221 = vpop.f32.mrb[0].mxu0
    %v222 = vadd.f32 %v149, %v221
    %v223 = vpop.f32.mrb[0].mxu0
    %v224 = vadd.f32 %v150, %v223
    %225 = vdwg.mxu0
    %v226 = vadd.f32 %v222, %v105
    %v227 = vadd.f32 %v224, %v109
    %v228 = vmul.f32 %v226, 0.5
    %v229 = vmul.f32 %v227, 0.5
    %v230 = vsel %vm59, %v226, %v228
    %v231 = vsel %vm60, %v227, %v229
    %v232 = vtanh.pop %v230
    %v233 = vtanh.pop %v231
    %v234 = vmul.f32 %v232, 0.5
    %v235 = vmul.f32 %v233, 0.5
    %v236 = vadd.f32 %v234, 0.5
    %v237 = vadd.f32 %v235, 0.5
    %v238 = vsel %vm59, %v232, %v236
    %v239 = vsel %vm60, %v233, %v237
    %241 = vrot.lane.b32.xlu0 %v139, 64
    %v242 = vpop.permute.xlu0 %241
    %v244 = vmul.f32 %v238, %v242
    %v245 = vmul.f32 %v238, %v239
    %247 = vrot.lane.b32.xlu0 %v245, 64
    %v248 = vpop.permute.xlu0 %247
    %v250 = vadd.f32 %v244, %v248
    %v251 = vtanh.pop %v250
    %v252 = vmul.f32 %v239, %v251
    %254 = vrot.lane.b32.xlu0 %v80, 96
    %v255 = vpop.permute.xlu0 %254
    %v257 = vmul.f32 %v252, %v255
    %259 = vrot.lane.b32.xlu0 %v257, 32
    %v260 = vpop.permute.xlu0 %259
    %vm262 = vcmask 258048
    %v263 = vsel %vm262, %v260, 0.0
    %264 = vadd.xlane.f32.xlu0 %v263
    %v265 = vpop.xlane.xlu0 %264
    %vm266 = vcmask 1044480
    %v267 = vsel %vm266, %v265, 0.0
    %v268 = vrot.slane %v267, 4
    %v269 = vadd.f32 %v267, %v268
    %v270 = vrot.slane %v269, 2
    %v271 = vadd.f32 %v269, %v270
    %v272 = vrot.slane %v271, 1
    %v273 = vadd.f32 %v271, %v272
    %v274 = vadd.f32 %v273, %v81
    %vm275 = vcmp.eq.s32.totalorder %v53, 0
    %277 = vset.pattern.permute.xlu0 0
    %278 = vperm.xlu0 %277, %v274
    %v279 = vpop.permute.xlu0 %278
    %v281 = vlaneseq
    %v282 = vshrl.u32 %v281, 7
    %v283 = vsub.s32 0, %v282
    %v284 = vrot.slane %v279, %v283
    %v285 = vsel %vm275, %v284, 0.0
    %286 = vset.pattern.permute.xlu0 2
    %287 = vperm.xlu0 %286, %v82
    %v288 = vpop.permute.xlu0 %287
    %v290 = vmul.f32 %v288, %v92
    %v291 = vmul.f32 %v288, %v96
    %293 = vrot.lane.b32.xlu0 %v252, 64
    %v294 = vpop.permute.xlu0 %293
    %v295 = vsel %vm151, %v294, 0
    %297 = vmatprep.subr.mxu0 %v63
    %298 = vmatpush1.msra.mxu0 %v62
    %299 = vmatprep.subr.mxu0 %v65
    %300 = vmatpush1.msra.mxu0 %v64
    %301 = vmatprep.subr.mxu0 %v67
    %302 = vmatpush1.msra.mxu0 %v66
    %303 = vmatprep.subr.mxu0 %v69
    %304 = vmatpush1.msra.mxu0 %v68
    %305 = vmatprep.subr.mxu0 %v71
    %306 = vmatpush1.msra.mxu0 %v70
    %307 = vmatprep.subr.mxu0 %v73
    %308 = vmatpush1.msra.mxu0 %v72
    %309 = vmatprep.subr.mxu0 %v75
    %310 = vmatpush1.msra.mxu0 %v74
    %311 = vmatprep.subr.mxu0 %v77
    %312 = vmatpush1.msra.mxu0 %v76
    %313 = vmatprep.subr.mxu0 0.0
    %314 = vmatpush1.msra.mxu0 0.0
    %315 = vmatprep.subr.mxu0 0.0
    %316 = vmatpush1.msra.mxu0 0.0
    %317 = vmatprep.subr.mxu0 0.0
    %318 = vmatpush1.msra.mxu0 0.0
    %319 = vmatprep.subr.mxu0 0.0
    %320 = vmatpush1.msra.mxu0 0.0
    %321 = vmatprep.subr.mxu0 0.0
    %322 = vmatpush1.msra.mxu0 0.0
    %323 = vmatprep.subr.mxu0 0.0
    %324 = vmatpush1.msra.mxu0 0.0
    %325 = vmatprep.subr.mxu0 0.0
    %326 = vmatpush1.msra.mxu0 0.0
    %327 = vmatprep.subr.mxu0 0.0
    %328 = vmatpush1.msra.mxu0 0.0
    %329 = vmatprep.subr.mxu0 0.0
    %330 = vmatpush1.msra.mxu0 0.0
    %331 = vmatprep.subr.mxu0 0.0
    %332 = vmatpush1.msra.mxu0 0.0
    %333 = vmatprep.subr.mxu0 0.0
    %334 = vmatpush1.msra.mxu0 0.0
    %335 = vmatprep.subr.mxu0 0.0
    %336 = vmatpush1.msra.mxu0 0.0
    %337 = vmatprep.subr.mxu0 0.0
    %338 = vmatpush1.msra.mxu0 0.0
    %339 = vmatprep.subr.mxu0 0.0
    %340 = vmatpush1.msra.mxu0 0.0
    %341 = vmatprep.subr.mxu0 0.0
    %342 = vmatpush1.msra.mxu0 0.0
    %343 = vmatprep.subr.mxu0 0.0
    %344 = vmatpush1.msra.mxu0 0.0
    %345 = vmatprep.subr.mxu0 0.0
    %346 = vmatpush1.msra.mxu0 0.0
    %347 = vmatprep.subr.mxu0 0.0
    %348 = vmatpush1.msra.mxu0 0.0
    %349 = vmatprep.subr.mxu0 0.0
    %350 = vmatpush1.msra.mxu0 0.0
    %351 = vmatprep.subr.mxu0 0.0
    %352 = vmatpush1.msra.mxu0 0.0
    %353 = vmatprep.subr.mxu0 0.0
    %354 = vmatpush1.msra.mxu0 0.0
    %355 = vmatprep.subr.mxu0 0.0
    %356 = vmatpush1.msra.mxu0 0.0
    %357 = vmatprep.subr.mxu0 0.0
    %358 = vmatpush1.msra.mxu0 0.0
    %359 = vmatprep.subr.mxu0 0.0
    %360 = vmatpush1.msra.mxu0 0.0
    %361 = vmatprep.mubr.f32.mxu0 0.0
    %362 = vmatmul.mubr.f32.gmra.mrb[0].mxu0 %v295
    %v363 = vpop.f32.mrb[0].mxu0
    %v364 = vadd.f32 %v290, %v363
    %v365 = vpop.f32.mrb[0].mxu0
    %v366 = vadd.f32 %v291, %v365
    %367 = vdwg.mxu0
    %v368 = vadd.f32 %v364, %v105
    %v369 = vadd.f32 %v366, %v109
    %v370 = vmul.f32 %v368, 0.5
    %v371 = vmul.f32 %v369, 0.5
    %v372 = vsel %vm59, %v368, %v370
    %v373 = vsel %vm60, %v369, %v371
    %v374 = vtanh.pop %v372
    %v375 = vtanh.pop %v373
    %v376 = vmul.f32 %v374, 0.5
    %v377 = vmul.f32 %v375, 0.5
    %v378 = vadd.f32 %v376, 0.5
    %v379 = vadd.f32 %v377, 0.5
    %v380 = vsel %vm59, %v374, %v378
    %v381 = vsel %vm60, %v375, %v379
    %v382 = vmul.f32 %v380, %v250
    %v383 = vmul.f32 %v380, %v381
    %385 = vrot.lane.b32.xlu0 %v383, 64
    %v386 = vpop.permute.xlu0 %385
    %v388 = vadd.f32 %v382, %v386
    %v389 = vtanh.pop %v388
    %v390 = vmul.f32 %v381, %v389
    %v391 = vmul.f32 %v390, %v255
    %393 = vrot.lane.b32.xlu0 %v391, 32
    %v394 = vpop.permute.xlu0 %393
    %v396 = vsel %vm262, %v394, 0.0
    %397 = vadd.xlane.f32.xlu0 %v396
    %v398 = vpop.xlane.xlu0 %397
    %v399 = vsel %vm266, %v398, 0.0
    %v400 = vrot.slane %v399, 4
    %v401 = vadd.f32 %v399, %v400
    %v402 = vrot.slane %v401, 2
    %v403 = vadd.f32 %v401, %v402
    %v404 = vrot.slane %v403, 1
    %v405 = vadd.f32 %v403, %v404
    %v406 = vadd.f32 %v405, %v81
    %vm407 = vcmp.eq.s32.totalorder %v53, 1
    %409 = vset.pattern.permute.xlu0 0
    %410 = vperm.xlu0 %409, %v406
    %v411 = vpop.permute.xlu0 %410
    %v413 = vlaneseq
    %v414 = vshrl.u32 %v413, 7
    %v415 = vsub.s32 0, %v414
    %v416 = vrot.slane %v411, %v415
    %v417 = vsel %vm407, %v416, %v285
    %418 = vset.pattern.permute.xlu0 3
    %419 = vperm.xlu0 %418, %v82
    %v420 = vpop.permute.xlu0 %419
    %v422 = vmul.f32 %v420, %v92
    %v423 = vmul.f32 %v420, %v96
    %425 = vrot.lane.b32.xlu0 %v390, 64
    %v426 = vpop.permute.xlu0 %425
    %v427 = vsel %vm151, %v426, 0
    %429 = vmatprep.subr.mxu0 %v63
    %430 = vmatpush1.msra.mxu0 %v62
    %431 = vmatprep.subr.mxu0 %v65
    %432 = vmatpush1.msra.mxu0 %v64
    %433 = vmatprep.subr.mxu0 %v67
    %434 = vmatpush1.msra.mxu0 %v66
    %435 = vmatprep.subr.mxu0 %v69
    %436 = vmatpush1.msra.mxu0 %v68
    %437 = vmatprep.subr.mxu0 %v71
    %438 = vmatpush1.msra.mxu0 %v70
    %439 = vmatprep.subr.mxu0 %v73
    %440 = vmatpush1.msra.mxu0 %v72
    %441 = vmatprep.subr.mxu0 %v75
    %442 = vmatpush1.msra.mxu0 %v74
    %443 = vmatprep.subr.mxu0 %v77
    %444 = vmatpush1.msra.mxu0 %v76
    %445 = vmatprep.subr.mxu0 0.0
    %446 = vmatpush1.msra.mxu0 0.0
    %447 = vmatprep.subr.mxu0 0.0
    %448 = vmatpush1.msra.mxu0 0.0
    %449 = vmatprep.subr.mxu0 0.0
    %450 = vmatpush1.msra.mxu0 0.0
    %451 = vmatprep.subr.mxu0 0.0
    %452 = vmatpush1.msra.mxu0 0.0
    %453 = vmatprep.subr.mxu0 0.0
    %454 = vmatpush1.msra.mxu0 0.0
    %455 = vmatprep.subr.mxu0 0.0
    %456 = vmatpush1.msra.mxu0 0.0
    %457 = vmatprep.subr.mxu0 0.0
    %458 = vmatpush1.msra.mxu0 0.0
    %459 = vmatprep.subr.mxu0 0.0
    %460 = vmatpush1.msra.mxu0 0.0
    %461 = vmatprep.subr.mxu0 0.0
    %462 = vmatpush1.msra.mxu0 0.0
    %463 = vmatprep.subr.mxu0 0.0
    %464 = vmatpush1.msra.mxu0 0.0
    %465 = vmatprep.subr.mxu0 0.0
    %466 = vmatpush1.msra.mxu0 0.0
    %467 = vmatprep.subr.mxu0 0.0
    %468 = vmatpush1.msra.mxu0 0.0
    %469 = vmatprep.subr.mxu0 0.0
    %470 = vmatpush1.msra.mxu0 0.0
    %471 = vmatprep.subr.mxu0 0.0
    %472 = vmatpush1.msra.mxu0 0.0
    %473 = vmatprep.subr.mxu0 0.0
    %474 = vmatpush1.msra.mxu0 0.0
    %475 = vmatprep.subr.mxu0 0.0
    %476 = vmatpush1.msra.mxu0 0.0
    %477 = vmatprep.subr.mxu0 0.0
    %478 = vmatpush1.msra.mxu0 0.0
    %479 = vmatprep.subr.mxu0 0.0
    %480 = vmatpush1.msra.mxu0 0.0
    %481 = vmatprep.subr.mxu0 0.0
    %482 = vmatpush1.msra.mxu0 0.0
    %483 = vmatprep.subr.mxu0 0.0
    %484 = vmatpush1.msra.mxu0 0.0
    %485 = vmatprep.subr.mxu0 0.0
    %486 = vmatpush1.msra.mxu0 0.0
    %487 = vmatprep.subr.mxu0 0.0
    %488 = vmatpush1.msra.mxu0 0.0
    %489 = vmatprep.subr.mxu0 0.0
    %490 = vmatpush1.msra.mxu0 0.0
    %491 = vmatprep.subr.mxu0 0.0
    %492 = vmatpush1.msra.mxu0 0.0
    %493 = vmatprep.mubr.f32.mxu0 0.0
    %494 = vmatmul.mubr.f32.gmra.mrb[0].mxu0 %v427
    %v495 = vpop.f32.mrb[0].mxu0
    %v496 = vadd.f32 %v422, %v495
    %v497 = vpop.f32.mrb[0].mxu0
    %v498 = vadd.f32 %v423, %v497
    %499 = vdwg.mxu0
    %v500 = vadd.f32 %v496, %v105
    %v501 = vadd.f32 %v498, %v109
    %v502 = vmul.f32 %v500, 0.5
    %v503 = vmul.f32 %v501, 0.5
    %v504 = vsel %vm59, %v500, %v502
    %v505 = vsel %vm60, %v501, %v503
    %v506 = vtanh.pop %v504
    %v507 = vtanh.pop %v505
    %v508 = vmul.f32 %v506, 0.5
    %v509 = vmul.f32 %v507, 0.5
    %v510 = vadd.f32 %v508, 0.5
    %v511 = vadd.f32 %v509, 0.5
    %v512 = vsel %vm59, %v506, %v510
    %v513 = vsel %vm60, %v507, %v511
    %v514 = vmul.f32 %v512, %v388
    %v515 = vmul.f32 %v512, %v513
    %517 = vrot.lane.b32.xlu0 %v515, 64
    %v518 = vpop.permute.xlu0 %517
    %v520 = vadd.f32 %v514, %v518
    %v521 = vtanh.pop %v520
    %v522 = vmul.f32 %v513, %v521
    %v523 = vmul.f32 %v522, %v255
    %525 = vrot.lane.b32.xlu0 %v523, 32
    %v526 = vpop.permute.xlu0 %525
    %v528 = vsel %vm262, %v526, 0.0
    %529 = vadd.xlane.f32.xlu0 %v528
    %v530 = vpop.xlane.xlu0 %529
    %v531 = vsel %vm266, %v530, 0.0
    %v532 = vrot.slane %v531, 4
    %v533 = vadd.f32 %v531, %v532
    %v534 = vrot.slane %v533, 2
    %v535 = vadd.f32 %v533, %v534
    %v536 = vrot.slane %v535, 1
    %v537 = vadd.f32 %v535, %v536
    %v538 = vadd.f32 %v537, %v81
    %vm539 = vcmp.eq.s32.totalorder %v53, 2
    %541 = vset.pattern.permute.xlu0 0
    %542 = vperm.xlu0 %541, %v538
    %v543 = vpop.permute.xlu0 %542
    %v545 = vlaneseq
    %v546 = vshrl.u32 %v545, 7
    %v547 = vsub.s32 0, %v546
    %v548 = vrot.slane %v543, %v547
    %v549 = vsel %vm539, %v548, %v417
    %550 = vset.pattern.permute.xlu0 4
    %551 = vperm.xlu0 %550, %v82
    %v552 = vpop.permute.xlu0 %551
    %v554 = vmul.f32 %v552, %v92
    %v555 = vmul.f32 %v552, %v96
    %557 = vrot.lane.b32.xlu0 %v522, 64
    %v558 = vpop.permute.xlu0 %557
    %v559 = vsel %vm151, %v558, 0
    %561 = vmatprep.subr.mxu0 %v63
    %562 = vmatpush1.msra.mxu0 %v62
    %563 = vmatprep.subr.mxu0 %v65
    %564 = vmatpush1.msra.mxu0 %v64
    %565 = vmatprep.subr.mxu0 %v67
    %566 = vmatpush1.msra.mxu0 %v66
    %567 = vmatprep.subr.mxu0 %v69
    %568 = vmatpush1.msra.mxu0 %v68
    %569 = vmatprep.subr.mxu0 %v71
    %570 = vmatpush1.msra.mxu0 %v70
    %571 = vmatprep.subr.mxu0 %v73
    %572 = vmatpush1.msra.mxu0 %v72
    %573 = vmatprep.subr.mxu0 %v75
    %574 = vmatpush1.msra.mxu0 %v74
    %575 = vmatprep.subr.mxu0 %v77
    %576 = vmatpush1.msra.mxu0 %v76
    %577 = vmatprep.subr.mxu0 0.0
    %578 = vmatpush1.msra.mxu0 0.0
    %579 = vmatprep.subr.mxu0 0.0
    %580 = vmatpush1.msra.mxu0 0.0
    %581 = vmatprep.subr.mxu0 0.0
    %582 = vmatpush1.msra.mxu0 0.0
    %583 = vmatprep.subr.mxu0 0.0
    %584 = vmatpush1.msra.mxu0 0.0
    %585 = vmatprep.subr.mxu0 0.0
    %586 = vmatpush1.msra.mxu0 0.0
    %587 = vmatprep.subr.mxu0 0.0
    %588 = vmatpush1.msra.mxu0 0.0
    %589 = vmatprep.subr.mxu0 0.0
    %590 = vmatpush1.msra.mxu0 0.0
    %591 = vmatprep.subr.mxu0 0.0
    %592 = vmatpush1.msra.mxu0 0.0
    %593 = vmatprep.subr.mxu0 0.0
    %594 = vmatpush1.msra.mxu0 0.0
    %595 = vmatprep.subr.mxu0 0.0
    %596 = vmatpush1.msra.mxu0 0.0
    %597 = vmatprep.subr.mxu0 0.0
    %598 = vmatpush1.msra.mxu0 0.0
    %599 = vmatprep.subr.mxu0 0.0
    %600 = vmatpush1.msra.mxu0 0.0
    %601 = vmatprep.subr.mxu0 0.0
    %602 = vmatpush1.msra.mxu0 0.0
    %603 = vmatprep.subr.mxu0 0.0
    %604 = vmatpush1.msra.mxu0 0.0
    %605 = vmatprep.subr.mxu0 0.0
    %606 = vmatpush1.msra.mxu0 0.0
    %607 = vmatprep.subr.mxu0 0.0
    %608 = vmatpush1.msra.mxu0 0.0
    %609 = vmatprep.subr.mxu0 0.0
    %610 = vmatpush1.msra.mxu0 0.0
    %611 = vmatprep.subr.mxu0 0.0
    %612 = vmatpush1.msra.mxu0 0.0
    %613 = vmatprep.subr.mxu0 0.0
    %614 = vmatpush1.msra.mxu0 0.0
    %615 = vmatprep.subr.mxu0 0.0
    %616 = vmatpush1.msra.mxu0 0.0
    %617 = vmatprep.subr.mxu0 0.0
    %618 = vmatpush1.msra.mxu0 0.0
    %619 = vmatprep.subr.mxu0 0.0
    %620 = vmatpush1.msra.mxu0 0.0
    %621 = vmatprep.subr.mxu0 0.0
    %622 = vmatpush1.msra.mxu0 0.0
    %623 = vmatprep.subr.mxu0 0.0
    %624 = vmatpush1.msra.mxu0 0.0
    %625 = vmatprep.mubr.f32.mxu0 0.0
    %626 = vmatmul.mubr.f32.gmra.mrb[0].mxu0 %v559
    %v627 = vpop.f32.mrb[0].mxu0
    %v628 = vadd.f32 %v554, %v627
    %v629 = vpop.f32.mrb[0].mxu0
    %v630 = vadd.f32 %v555, %v629
    %631 = vdwg.mxu0
    %v632 = vadd.f32 %v628, %v105
    %v633 = vadd.f32 %v630, %v109
    %v634 = vmul.f32 %v632, 0.5
    %v635 = vmul.f32 %v633, 0.5
    %v636 = vsel %vm59, %v632, %v634
    %v637 = vsel %vm60, %v633, %v635
    %v638 = vtanh.pop %v636
    %v639 = vtanh.pop %v637
    %v640 = vmul.f32 %v638, 0.5
    %v641 = vmul.f32 %v639, 0.5
    %v642 = vadd.f32 %v640, 0.5
    %v643 = vadd.f32 %v641, 0.5
    %v644 = vsel %vm59, %v638, %v642
    %v645 = vsel %vm60, %v639, %v643
    %v646 = vmul.f32 %v644, %v520
    %v647 = vmul.f32 %v644, %v645
    %649 = vrot.lane.b32.xlu0 %v647, 64
    %v650 = vpop.permute.xlu0 %649
    %v652 = vadd.f32 %v646, %v650
    %v653 = vtanh.pop %v652
    %v654 = vmul.f32 %v645, %v653
    %v655 = vmul.f32 %v654, %v255
    %657 = vrot.lane.b32.xlu0 %v655, 32
    %v658 = vpop.permute.xlu0 %657
    %v660 = vsel %vm262, %v658, 0.0
    %661 = vadd.xlane.f32.xlu0 %v660
    %v662 = vpop.xlane.xlu0 %661
    %v663 = vsel %vm266, %v662, 0.0
    %v664 = vrot.slane %v663, 4
    %v665 = vadd.f32 %v663, %v664
    %v666 = vrot.slane %v665, 2
    %v667 = vadd.f32 %v665, %v666
    %v668 = vrot.slane %v667, 1
    %v669 = vadd.f32 %v667, %v668
    %v670 = vadd.f32 %v669, %v81
    %vm671 = vcmp.eq.s32.totalorder %v53, 3
    %673 = vset.pattern.permute.xlu0 0
    %674 = vperm.xlu0 %673, %v670
    %v675 = vpop.permute.xlu0 %674
    %v677 = vlaneseq
    %v678 = vshrl.u32 %v677, 7
    %v679 = vsub.s32 0, %v678
    %v680 = vrot.slane %v675, %v679
    %v681 = vsel %vm671, %v680, %v549
    %682 = vset.pattern.permute.xlu0 5
    %683 = vperm.xlu0 %682, %v82
    %v684 = vpop.permute.xlu0 %683
    %v686 = vmul.f32 %v684, %v92
    %v687 = vmul.f32 %v684, %v96
    %689 = vrot.lane.b32.xlu0 %v654, 64
    %v690 = vpop.permute.xlu0 %689
    %v691 = vsel %vm151, %v690, 0
    %693 = vmatprep.subr.mxu0 %v63
    %694 = vmatpush1.msra.mxu0 %v62
    %695 = vmatprep.subr.mxu0 %v65
    %696 = vmatpush1.msra.mxu0 %v64
    %697 = vmatprep.subr.mxu0 %v67
    %698 = vmatpush1.msra.mxu0 %v66
    %699 = vmatprep.subr.mxu0 %v69
    %700 = vmatpush1.msra.mxu0 %v68
    %701 = vmatprep.subr.mxu0 %v71
    %702 = vmatpush1.msra.mxu0 %v70
    %703 = vmatprep.subr.mxu0 %v73
    %704 = vmatpush1.msra.mxu0 %v72
    %705 = vmatprep.subr.mxu0 %v75
    %706 = vmatpush1.msra.mxu0 %v74
    %707 = vmatprep.subr.mxu0 %v77
    %708 = vmatpush1.msra.mxu0 %v76
    %709 = vmatprep.subr.mxu0 0.0
    %710 = vmatpush1.msra.mxu0 0.0
    %711 = vmatprep.subr.mxu0 0.0
    %712 = vmatpush1.msra.mxu0 0.0
    %713 = vmatprep.subr.mxu0 0.0
    %714 = vmatpush1.msra.mxu0 0.0
    %715 = vmatprep.subr.mxu0 0.0
    %716 = vmatpush1.msra.mxu0 0.0
    %717 = vmatprep.subr.mxu0 0.0
    %718 = vmatpush1.msra.mxu0 0.0
    %719 = vmatprep.subr.mxu0 0.0
    %720 = vmatpush1.msra.mxu0 0.0
    %721 = vmatprep.subr.mxu0 0.0
    %722 = vmatpush1.msra.mxu0 0.0
    %723 = vmatprep.subr.mxu0 0.0
    %724 = vmatpush1.msra.mxu0 0.0
    %725 = vmatprep.subr.mxu0 0.0
    %726 = vmatpush1.msra.mxu0 0.0
    %727 = vmatprep.subr.mxu0 0.0
    %728 = vmatpush1.msra.mxu0 0.0
    %729 = vmatprep.subr.mxu0 0.0
    %730 = vmatpush1.msra.mxu0 0.0
    %731 = vmatprep.subr.mxu0 0.0
    %732 = vmatpush1.msra.mxu0 0.0
    %733 = vmatprep.subr.mxu0 0.0
    %734 = vmatpush1.msra.mxu0 0.0
    %735 = vmatprep.subr.mxu0 0.0
    %736 = vmatpush1.msra.mxu0 0.0
    %737 = vmatprep.subr.mxu0 0.0
    %738 = vmatpush1.msra.mxu0 0.0
    %739 = vmatprep.subr.mxu0 0.0
    %740 = vmatpush1.msra.mxu0 0.0
    %741 = vmatprep.subr.mxu0 0.0
    %742 = vmatpush1.msra.mxu0 0.0
    %743 = vmatprep.subr.mxu0 0.0
    %744 = vmatpush1.msra.mxu0 0.0
    %745 = vmatprep.subr.mxu0 0.0
    %746 = vmatpush1.msra.mxu0 0.0
    %747 = vmatprep.subr.mxu0 0.0
    %748 = vmatpush1.msra.mxu0 0.0
    %749 = vmatprep.subr.mxu0 0.0
    %750 = vmatpush1.msra.mxu0 0.0
    %751 = vmatprep.subr.mxu0 0.0
    %752 = vmatpush1.msra.mxu0 0.0
    %753 = vmatprep.subr.mxu0 0.0
    %754 = vmatpush1.msra.mxu0 0.0
    %755 = vmatprep.subr.mxu0 0.0
    %756 = vmatpush1.msra.mxu0 0.0
    %757 = vmatprep.mubr.f32.mxu0 0.0
    %758 = vmatmul.mubr.f32.gmra.mrb[0].mxu0 %v691
    %v759 = vpop.f32.mrb[0].mxu0
    %v760 = vadd.f32 %v686, %v759
    %v761 = vpop.f32.mrb[0].mxu0
    %v762 = vadd.f32 %v687, %v761
    %763 = vdwg.mxu0
    %v764 = vadd.f32 %v760, %v105
    %v765 = vadd.f32 %v762, %v109
    %v766 = vmul.f32 %v764, 0.5
    %v767 = vmul.f32 %v765, 0.5
    %v768 = vsel %vm59, %v764, %v766
    %v769 = vsel %vm60, %v765, %v767
    %v770 = vtanh.pop %v768
    %v771 = vtanh.pop %v769
    %v772 = vmul.f32 %v770, 0.5
    %v773 = vmul.f32 %v771, 0.5
    %v774 = vadd.f32 %v772, 0.5
    %v775 = vadd.f32 %v773, 0.5
    %v776 = vsel %vm59, %v770, %v774
    %v777 = vsel %vm60, %v771, %v775
    %v778 = vmul.f32 %v776, %v652
    %v779 = vmul.f32 %v776, %v777
    %781 = vrot.lane.b32.xlu0 %v779, 64
    %v782 = vpop.permute.xlu0 %781
    %v784 = vadd.f32 %v778, %v782
    %v785 = vtanh.pop %v784
    %v786 = vmul.f32 %v777, %v785
    %v787 = vmul.f32 %v786, %v255
    %789 = vrot.lane.b32.xlu0 %v787, 32
    %v790 = vpop.permute.xlu0 %789
    %v792 = vsel %vm262, %v790, 0.0
    %793 = vadd.xlane.f32.xlu0 %v792
    %v794 = vpop.xlane.xlu0 %793
    %v795 = vsel %vm266, %v794, 0.0
    %v796 = vrot.slane %v795, 4
    %v797 = vadd.f32 %v795, %v796
    %v798 = vrot.slane %v797, 2
    %v799 = vadd.f32 %v797, %v798
    %v800 = vrot.slane %v799, 1
    %v801 = vadd.f32 %v799, %v800
    %v802 = vadd.f32 %v801, %v81
    %vm803 = vcmp.eq.s32.totalorder %v53, 4
    %805 = vset.pattern.permute.xlu0 0
    %806 = vperm.xlu0 %805, %v802
    %v807 = vpop.permute.xlu0 %806
    %v809 = vlaneseq
    %v810 = vshrl.u32 %v809, 7
    %v811 = vsub.s32 0, %v810
    %v812 = vrot.slane %v807, %v811
    %v813 = vsel %vm803, %v812, %v681
    %814 = vset.pattern.permute.xlu0 6
    %815 = vperm.xlu0 %814, %v82
    %v816 = vpop.permute.xlu0 %815
    %v818 = vmul.f32 %v816, %v92
    %v819 = vmul.f32 %v816, %v96
    %821 = vrot.lane.b32.xlu0 %v786, 64
    %v822 = vpop.permute.xlu0 %821
    %v823 = vsel %vm151, %v822, 0
    %825 = vmatprep.subr.mxu0 %v63
    %826 = vmatpush1.msra.mxu0 %v62
    %827 = vmatprep.subr.mxu0 %v65
    %828 = vmatpush1.msra.mxu0 %v64
    %829 = vmatprep.subr.mxu0 %v67
    %830 = vmatpush1.msra.mxu0 %v66
    %831 = vmatprep.subr.mxu0 %v69
    %832 = vmatpush1.msra.mxu0 %v68
    %833 = vmatprep.subr.mxu0 %v71
    %834 = vmatpush1.msra.mxu0 %v70
    %835 = vmatprep.subr.mxu0 %v73
    %836 = vmatpush1.msra.mxu0 %v72
    %837 = vmatprep.subr.mxu0 %v75
    %838 = vmatpush1.msra.mxu0 %v74
    %839 = vmatprep.subr.mxu0 %v77
    %840 = vmatpush1.msra.mxu0 %v76
    %841 = vmatprep.subr.mxu0 0.0
    %842 = vmatpush1.msra.mxu0 0.0
    %843 = vmatprep.subr.mxu0 0.0
    %844 = vmatpush1.msra.mxu0 0.0
    %845 = vmatprep.subr.mxu0 0.0
    %846 = vmatpush1.msra.mxu0 0.0
    %847 = vmatprep.subr.mxu0 0.0
    %848 = vmatpush1.msra.mxu0 0.0
    %849 = vmatprep.subr.mxu0 0.0
    %850 = vmatpush1.msra.mxu0 0.0
    %851 = vmatprep.subr.mxu0 0.0
    %852 = vmatpush1.msra.mxu0 0.0
    %853 = vmatprep.subr.mxu0 0.0
    %854 = vmatpush1.msra.mxu0 0.0
    %855 = vmatprep.subr.mxu0 0.0
    %856 = vmatpush1.msra.mxu0 0.0
    %857 = vmatprep.subr.mxu0 0.0
    %858 = vmatpush1.msra.mxu0 0.0
    %859 = vmatprep.subr.mxu0 0.0
    %860 = vmatpush1.msra.mxu0 0.0
    %861 = vmatprep.subr.mxu0 0.0
    %862 = vmatpush1.msra.mxu0 0.0
    %863 = vmatprep.subr.mxu0 0.0
    %864 = vmatpush1.msra.mxu0 0.0
    %865 = vmatprep.subr.mxu0 0.0
    %866 = vmatpush1.msra.mxu0 0.0
    %867 = vmatprep.subr.mxu0 0.0
    %868 = vmatpush1.msra.mxu0 0.0
    %869 = vmatprep.subr.mxu0 0.0
    %870 = vmatpush1.msra.mxu0 0.0
    %871 = vmatprep.subr.mxu0 0.0
    %872 = vmatpush1.msra.mxu0 0.0
    %873 = vmatprep.subr.mxu0 0.0
    %874 = vmatpush1.msra.mxu0 0.0
    %875 = vmatprep.subr.mxu0 0.0
    %876 = vmatpush1.msra.mxu0 0.0
    %877 = vmatprep.subr.mxu0 0.0
    %878 = vmatpush1.msra.mxu0 0.0
    %879 = vmatprep.subr.mxu0 0.0
    %880 = vmatpush1.msra.mxu0 0.0
    %881 = vmatprep.subr.mxu0 0.0
    %882 = vmatpush1.msra.mxu0 0.0
    %883 = vmatprep.subr.mxu0 0.0
    %884 = vmatpush1.msra.mxu0 0.0
    %885 = vmatprep.subr.mxu0 0.0
    %886 = vmatpush1.msra.mxu0 0.0
    %887 = vmatprep.subr.mxu0 0.0
    %888 = vmatpush1.msra.mxu0 0.0
    %889 = vmatprep.mubr.f32.mxu0 0.0
    %890 = vmatmul.mubr.f32.gmra.mrb[0].mxu0 %v823
    %v891 = vpop.f32.mrb[0].mxu0
    %v892 = vadd.f32 %v818, %v891
    %v893 = vpop.f32.mrb[0].mxu0
    %v894 = vadd.f32 %v819, %v893
    %895 = vdwg.mxu0
    %v896 = vadd.f32 %v892, %v105
    %v897 = vadd.f32 %v894, %v109
    %v898 = vmul.f32 %v896, 0.5
    %v899 = vmul.f32 %v897, 0.5
    %v900 = vsel %vm59, %v896, %v898
    %v901 = vsel %vm60, %v897, %v899
    %v902 = vtanh.pop %v900
    %v903 = vtanh.pop %v901
    %v904 = vmul.f32 %v902, 0.5
    %v905 = vmul.f32 %v903, 0.5
    %v906 = vadd.f32 %v904, 0.5
    %v907 = vadd.f32 %v905, 0.5
    %v908 = vsel %vm59, %v902, %v906
    %v909 = vsel %vm60, %v903, %v907
    %v910 = vmul.f32 %v908, %v784
    %v911 = vmul.f32 %v908, %v909
    %913 = vrot.lane.b32.xlu0 %v911, 64
    %v914 = vpop.permute.xlu0 %913
    %v916 = vadd.f32 %v910, %v914
    %v917 = vtanh.pop %v916
    %v918 = vmul.f32 %v909, %v917
    %v919 = vmul.f32 %v918, %v255
    %921 = vrot.lane.b32.xlu0 %v919, 32
    %v922 = vpop.permute.xlu0 %921
    %v924 = vsel %vm262, %v922, 0.0
    %925 = vadd.xlane.f32.xlu0 %v924
    %v926 = vpop.xlane.xlu0 %925
    %v927 = vsel %vm266, %v926, 0.0
    %v928 = vrot.slane %v927, 4
    %v929 = vadd.f32 %v927, %v928
    %v930 = vrot.slane %v929, 2
    %v931 = vadd.f32 %v929, %v930
    %v932 = vrot.slane %v931, 1
    %v933 = vadd.f32 %v931, %v932
    %v934 = vadd.f32 %v933, %v81
    %vm935 = vcmp.eq.s32.totalorder %v53, 5
    %937 = vset.pattern.permute.xlu0 0
    %938 = vperm.xlu0 %937, %v934
    %v939 = vpop.permute.xlu0 %938
    %v941 = vlaneseq
    %v942 = vshrl.u32 %v941, 7
    %v943 = vsub.s32 0, %v942
    %v944 = vrot.slane %v939, %v943
    %v945 = vsel %vm935, %v944, %v813
    %946 = vset.pattern.permute.xlu0 7
    %947 = vperm.xlu0 %946, %v82
    %v948 = vpop.permute.xlu0 %947
    %v950 = vmul.f32 %v948, %v92
    %v951 = vmul.f32 %v948, %v96
    %953 = vrot.lane.b32.xlu0 %v918, 64
    %v954 = vpop.permute.xlu0 %953
    %v955 = vsel %vm151, %v954, 0
    %957 = vmatprep.subr.mxu0 %v63
    %958 = vmatpush1.msra.mxu0 %v62
    %959 = vmatprep.subr.mxu0 %v65
    %960 = vmatpush1.msra.mxu0 %v64
    %961 = vmatprep.subr.mxu0 %v67
    %962 = vmatpush1.msra.mxu0 %v66
    %963 = vmatprep.subr.mxu0 %v69
    %964 = vmatpush1.msra.mxu0 %v68
    %965 = vmatprep.subr.mxu0 %v71
    %966 = vmatpush1.msra.mxu0 %v70
    %967 = vmatprep.subr.mxu0 %v73
    %968 = vmatpush1.msra.mxu0 %v72
    %969 = vmatprep.subr.mxu0 %v75
    %970 = vmatpush1.msra.mxu0 %v74
    %971 = vmatprep.subr.mxu0 %v77
    %972 = vmatpush1.msra.mxu0 %v76
    %973 = vmatprep.subr.mxu0 0.0
    %974 = vmatpush1.msra.mxu0 0.0
    %975 = vmatprep.subr.mxu0 0.0
    %976 = vmatpush1.msra.mxu0 0.0
    %977 = vmatprep.subr.mxu0 0.0
    %978 = vmatpush1.msra.mxu0 0.0
    %979 = vmatprep.subr.mxu0 0.0
    %980 = vmatpush1.msra.mxu0 0.0
    %981 = vmatprep.subr.mxu0 0.0
    %982 = vmatpush1.msra.mxu0 0.0
    %983 = vmatprep.subr.mxu0 0.0
    %984 = vmatpush1.msra.mxu0 0.0
    %985 = vmatprep.subr.mxu0 0.0
    %986 = vmatpush1.msra.mxu0 0.0
    %987 = vmatprep.subr.mxu0 0.0
    %988 = vmatpush1.msra.mxu0 0.0
    %989 = vmatprep.subr.mxu0 0.0
    %990 = vmatpush1.msra.mxu0 0.0
    %991 = vmatprep.subr.mxu0 0.0
    %992 = vmatpush1.msra.mxu0 0.0
    %993 = vmatprep.subr.mxu0 0.0
    %994 = vmatpush1.msra.mxu0 0.0
    %995 = vmatprep.subr.mxu0 0.0
    %996 = vmatpush1.msra.mxu0 0.0
    %997 = vmatprep.subr.mxu0 0.0
    %998 = vmatpush1.msra.mxu0 0.0
    %999 = vmatprep.subr.mxu0 0.0
    %1000 = vmatpush1.msra.mxu0 0.0
    %1001 = vmatprep.subr.mxu0 0.0
    %1002 = vmatpush1.msra.mxu0 0.0
    %1003 = vmatprep.subr.mxu0 0.0
    %1004 = vmatpush1.msra.mxu0 0.0
    %1005 = vmatprep.subr.mxu0 0.0
    %1006 = vmatpush1.msra.mxu0 0.0
    %1007 = vmatprep.subr.mxu0 0.0
    %1008 = vmatpush1.msra.mxu0 0.0
    %1009 = vmatprep.subr.mxu0 0.0
    %1010 = vmatpush1.msra.mxu0 0.0
    %1011 = vmatprep.subr.mxu0 0.0
    %1012 = vmatpush1.msra.mxu0 0.0
    %1013 = vmatprep.subr.mxu0 0.0
    %1014 = vmatpush1.msra.mxu0 0.0
    %1015 = vmatprep.subr.mxu0 0.0
    %1016 = vmatpush1.msra.mxu0 0.0
    %1017 = vmatprep.subr.mxu0 0.0
    %1018 = vmatpush1.msra.mxu0 0.0
    %1019 = vmatprep.subr.mxu0 0.0
    %1020 = vmatpush1.msra.mxu0 0.0
    %1021 = vmatprep.mubr.f32.mxu0 0.0
    %1022 = vmatmul.mubr.f32.gmra.mrb[0].mxu0 %v955
    %v1023 = vpop.f32.mrb[0].mxu0
    %v1024 = vadd.f32 %v950, %v1023
    %v1025 = vpop.f32.mrb[0].mxu0
    %v1026 = vadd.f32 %v951, %v1025
    %1027 = vdwg.mxu0
    %v1028 = vadd.f32 %v1024, %v105
    %v1029 = vadd.f32 %v1026, %v109
    %v1030 = vmul.f32 %v1028, 0.5
    %v1031 = vmul.f32 %v1029, 0.5
    %v1032 = vsel %vm59, %v1028, %v1030
    %v1033 = vsel %vm60, %v1029, %v1031
    %v1034 = vtanh.pop %v1032
    %v1035 = vtanh.pop %v1033
    %v1036 = vmul.f32 %v1034, 0.5
    %v1037 = vmul.f32 %v1035, 0.5
    %v1038 = vadd.f32 %v1036, 0.5
    %v1039 = vadd.f32 %v1037, 0.5
    %v1040 = vsel %vm59, %v1034, %v1038
    %v1041 = vsel %vm60, %v1035, %v1039
    %v1042 = vmul.f32 %v1040, %v916
    %v1043 = vmul.f32 %v1040, %v1041
    %1045 = vrot.lane.b32.xlu0 %v1043, 64
    %v1046 = vpop.permute.xlu0 %1045
    %v1048 = vadd.f32 %v1042, %v1046
    %v1049 = vtanh.pop %v1048
    %v1050 = vmul.f32 %v1041, %v1049
    %v1051 = vmul.f32 %v1050, %v255
    %1053 = vrot.lane.b32.xlu0 %v1051, 32
    %v1054 = vpop.permute.xlu0 %1053
    %v1056 = vsel %vm262, %v1054, 0.0
    %1057 = vadd.xlane.f32.xlu0 %v1056
    %v1058 = vpop.xlane.xlu0 %1057
    %v1059 = vsel %vm266, %v1058, 0.0
    %v1060 = vrot.slane %v1059, 4
    %v1061 = vadd.f32 %v1059, %v1060
    %v1062 = vrot.slane %v1061, 2
    %v1063 = vadd.f32 %v1061, %v1062
    %v1064 = vrot.slane %v1063, 1
    %v1065 = vadd.f32 %v1063, %v1064
    %v1066 = vadd.f32 %v1065, %v81
    %vm1067 = vcmp.eq.s32.totalorder %v53, 6
    %1069 = vset.pattern.permute.xlu0 0
    %1070 = vperm.xlu0 %1069, %v1066
    %v1071 = vpop.permute.xlu0 %1070
    %v1073 = vlaneseq
    %v1074 = vshrl.u32 %v1073, 7
    %v1075 = vsub.s32 0, %v1074
    %v1076 = vrot.slane %v1071, %v1075
    %v1077 = vsel %vm1067, %v1076, %v945
    %1078 = vset.pattern.permute.xlu0 8
    %1079 = vperm.xlu0 %1078, %v82
    %v1080 = vpop.permute.xlu0 %1079
    %v1082 = vmul.f32 %v1080, %v92
    %v1083 = vmul.f32 %v1080, %v96
    %1085 = vrot.lane.b32.xlu0 %v1050, 64
    %v1086 = vpop.permute.xlu0 %1085
    %v1087 = vsel %vm151, %v1086, 0
    %1089 = vmatprep.subr.mxu0 %v63
    %1090 = vmatpush1.msra.mxu0 %v62
    %1091 = vmatprep.subr.mxu0 %v65
    %1092 = vmatpush1.msra.mxu0 %v64
    %1093 = vmatprep.subr.mxu0 %v67
    %1094 = vmatpush1.msra.mxu0 %v66
    %1095 = vmatprep.subr.mxu0 %v69
    %1096 = vmatpush1.msra.mxu0 %v68
    %1097 = vmatprep.subr.mxu0 %v71
    %1098 = vmatpush1.msra.mxu0 %v70
    %1099 = vmatprep.subr.mxu0 %v73
    %1100 = vmatpush1.msra.mxu0 %v72
    %1101 = vmatprep.subr.mxu0 %v75
    %1102 = vmatpush1.msra.mxu0 %v74
    %1103 = vmatprep.subr.mxu0 %v77
    %1104 = vmatpush1.msra.mxu0 %v76
    %1105 = vmatprep.subr.mxu0 0.0
    %1106 = vmatpush1.msra.mxu0 0.0
    %1107 = vmatprep.subr.mxu0 0.0
    %1108 = vmatpush1.msra.mxu0 0.0
    %1109 = vmatprep.subr.mxu0 0.0
    %1110 = vmatpush1.msra.mxu0 0.0
    %1111 = vmatprep.subr.mxu0 0.0
    %1112 = vmatpush1.msra.mxu0 0.0
    %1113 = vmatprep.subr.mxu0 0.0
    %1114 = vmatpush1.msra.mxu0 0.0
    %1115 = vmatprep.subr.mxu0 0.0
    %1116 = vmatpush1.msra.mxu0 0.0
    %1117 = vmatprep.subr.mxu0 0.0
    %1118 = vmatpush1.msra.mxu0 0.0
    %1119 = vmatprep.subr.mxu0 0.0
    %1120 = vmatpush1.msra.mxu0 0.0
    %1121 = vmatprep.subr.mxu0 0.0
    %1122 = vmatpush1.msra.mxu0 0.0
    %1123 = vmatprep.subr.mxu0 0.0
    %1124 = vmatpush1.msra.mxu0 0.0
    %1125 = vmatprep.subr.mxu0 0.0
    %1126 = vmatpush1.msra.mxu0 0.0
    %1127 = vmatprep.subr.mxu0 0.0
    %1128 = vmatpush1.msra.mxu0 0.0
    %1129 = vmatprep.subr.mxu0 0.0
    %1130 = vmatpush1.msra.mxu0 0.0
    %1131 = vmatprep.subr.mxu0 0.0
    %1132 = vmatpush1.msra.mxu0 0.0
    %1133 = vmatprep.subr.mxu0 0.0
    %1134 = vmatpush1.msra.mxu0 0.0
    %1135 = vmatprep.subr.mxu0 0.0
    %1136 = vmatpush1.msra.mxu0 0.0
    %1137 = vmatprep.subr.mxu0 0.0
    %1138 = vmatpush1.msra.mxu0 0.0
    %1139 = vmatprep.subr.mxu0 0.0
    %1140 = vmatpush1.msra.mxu0 0.0
    %1141 = vmatprep.subr.mxu0 0.0
    %1142 = vmatpush1.msra.mxu0 0.0
    %1143 = vmatprep.subr.mxu0 0.0
    %1144 = vmatpush1.msra.mxu0 0.0
    %1145 = vmatprep.subr.mxu0 0.0
    %1146 = vmatpush1.msra.mxu0 0.0
    %1147 = vmatprep.subr.mxu0 0.0
    %1148 = vmatpush1.msra.mxu0 0.0
    %1149 = vmatprep.subr.mxu0 0.0
    %1150 = vmatpush1.msra.mxu0 0.0
    %1151 = vmatprep.subr.mxu0 0.0
    %1152 = vmatpush1.msra.mxu0 0.0
    %1153 = vmatprep.mubr.f32.mxu0 0.0
    %1154 = vmatmul.mubr.f32.gmra.mrb[0].mxu0 %v1087
    %v1155 = vpop.f32.mrb[0].mxu0
    %v1156 = vadd.f32 %v1082, %v1155
    %v1157 = vpop.f32.mrb[0].mxu0
    %v1158 = vadd.f32 %v1083, %v1157
    %1159 = vdwg.mxu0
    %v1160 = vadd.f32 %v1156, %v105
    %v1161 = vadd.f32 %v1158, %v109
    %v1162 = vmul.f32 %v1160, 0.5
    %v1163 = vmul.f32 %v1161, 0.5
    %v1164 = vsel %vm59, %v1160, %v1162
    %v1165 = vsel %vm60, %v1161, %v1163
    %v1166 = vtanh.pop %v1164
    %v1167 = vtanh.pop %v1165
    %v1168 = vmul.f32 %v1166, 0.5
    %v1169 = vmul.f32 %v1167, 0.5
    %v1170 = vadd.f32 %v1168, 0.5
    %v1171 = vadd.f32 %v1169, 0.5
    %v1172 = vsel %vm59, %v1166, %v1170
    %v1173 = vsel %vm60, %v1167, %v1171
    %v1174 = vmul.f32 %v1172, %v1048
    %v1175 = vmul.f32 %v1172, %v1173
    %1177 = vrot.lane.b32.xlu0 %v1175, 64
    %v1178 = vpop.permute.xlu0 %1177
    %v1180 = vadd.f32 %v1174, %v1178
    %v1181 = vtanh.pop %v1180
    %v1182 = vmul.f32 %v1173, %v1181
    %v1183 = vmul.f32 %v1182, %v255
    %1185 = vrot.lane.b32.xlu0 %v1183, 32
    %v1186 = vpop.permute.xlu0 %1185
    %v1188 = vsel %vm262, %v1186, 0.0
    %1189 = vadd.xlane.f32.xlu0 %v1188
    %v1190 = vpop.xlane.xlu0 %1189
    %v1191 = vsel %vm266, %v1190, 0.0
    %v1192 = vrot.slane %v1191, 4
    %v1193 = vadd.f32 %v1191, %v1192
    %v1194 = vrot.slane %v1193, 2
    %v1195 = vadd.f32 %v1193, %v1194
    %v1196 = vrot.slane %v1195, 1
    %v1197 = vadd.f32 %v1195, %v1196
    %v1198 = vadd.f32 %v1197, %v81
    %vm1199 = vcmp.eq.s32.totalorder %v53, 7
    %1201 = vset.pattern.permute.xlu0 0
    %1202 = vperm.xlu0 %1201, %v1198
    %v1203 = vpop.permute.xlu0 %1202
    %v1205 = vlaneseq
    %v1206 = vshrl.u32 %v1205, 7
    %v1207 = vsub.s32 0, %v1206
    %v1208 = vrot.slane %v1203, %v1207
    %v1209 = vsel %vm1199, %v1208, %v1077
    %1210 = vst [vmem:[#allocation8] sm:$0x1] %v1209
    // Predicated region
    $region34: #{tpu_custom_call.1} parent=1 // pred_check
      _
    $region35: #{tpu_custom_call.1} parent=1 // pred_check_branch
      %1212 = sbr.rel (0) target = $region37
    $region36: #{tpu_custom_call.1} parent=1 // pred_region
      %s1214 = ssub.s32 16, 16
      %1215 = vsyncadd [#allocation5], %s1214
      %s1217 = sshll.u32 [#allocation8], 4
      %s1218 = int_to_ptr.vmem [resolvable:$true] %s1217
      %1220 = dma.vmem_to_hbm [thread:$0]  %s1218, 16, %s6, [#allocation5]
    $region37: #{tpu_custom_call.1} parent=1 // pred_fallthru
      _
    // Predicated region
    $region38: #{tpu_custom_call.1} parent=1 // pred_check
      _
    $region39: #{tpu_custom_call.1} parent=1 // pred_check_branch
      %1222 = sbr.rel (0) target = $region41
    $region40: #{tpu_custom_call.1} parent=1 // pred_region
      %1223 = dma.done [#allocation5], 16
    $region41: #{tpu_custom_call.1} parent=1 // pred_fallthru
      _
    %1224 = vsyncpa [#allocation4], 1
    %1225 = vsyncpa [#allocation7], 1
    %1226 = vsyncpa [#allocation5], 1

</llo_original>
